<compile_context>
chip_gen: v6e
topology: v6e:2x2x1
jax: 0.10.0
libtpu: 0.0.40
codegen_flags: <defaults>
</compile_context>

<pallas_src>
import jax
import jax.numpy as jnp
import numpy as np
from jax import lax
from jax.experimental import pallas as pl
from jax.experimental.pallas import tpu as pltpu


def _default_exp_dtype():
    """bf16 exp only on generations with bf16 EUP/VPU (v6e, v7x)."""
    try:
        kind = jax.devices()[0].device_kind.lower()
    except Exception:
        return jnp.float32
    if any(tag in kind for tag in ("v6", "v7", "7x")):
        return jnp.bfloat16
    return jnp.float32


def _pick_tile(hw_pad, cap):
    """Largest multiple of 128 <= cap that divides hw_pad (hw_pad % 128 == 0)."""
    t = min(cap, hw_pad)
    t -= t % 128
    t = max(t, 128)
    while hw_pad % t:
        t -= 128
    return t


def _make_danet_kernel(tq, tk, hw, hw_pad, compute_dtype, exp_dtype):
    cdt = compute_dtype
    edt = exp_dtype
    need_mask = hw_pad != hw
    nk = hw_pad // tk          # static: in-kernel key loop, grid has no k axis

    def kernel(gamma_ref, x_ref, wq_ref, wk_ref, wv_ref, o_ref,
               attn_c_ref, k_scr, v_scr):
        q_idx = pl.program_id(1)
        gamma_c = gamma_ref[0]
        gamma_p = gamma_ref[1]

        x_b = x_ref.at[0]                                   # (C, HWp) f32 view

        # ---------------------------------------------------------------
        # One-time prep per batch element (q axis is "arbitrary" -> the
        # q == 0 step runs first on the owning core): channel attention
        # matrix and K/V projections, cached in VMEM scratch.
        # ---------------------------------------------------------------
        @pl.when(q_idx == 0)
        def _():
            x_full = x_b[...]                               # (C, HWp) f32
            # Channel energy E = X X^T (zero padding columns contribute 0).
            e = lax.dot_general(x_full, x_full, (((1,), (1,)), ((), ())),
                                preferred_element_type=jnp.float32)  # (C, C)
            # softmax(rowmax(E) - E) == exp(rowmin(E) - E) / rowsum.
            p = jnp.exp(jnp.min(e, axis=-1, keepdims=True) - e)
            inv = pl.reciprocal(jnp.sum(p, axis=-1, keepdims=True), approx=True)
            attn_c_ref[...] = p * (gamma_c * inv)           # gamma_c folded in
            # Key / value projections (f32 matmul once per batch element).
            k_scr[...] = jnp.dot(wk_ref[...], x_full,
                                 preferred_element_type=jnp.float32).astype(cdt)
            v_scr[...] = jnp.dot(wv_ref[...], x_full,
                                 preferred_element_type=jnp.float32).astype(cdt)

        # ---------------------------------------------------------------
        # This q tile: project queries, run the flash position attention
        # over all key blocks with an in-kernel loop.
        # ---------------------------------------------------------------
        qoff = pl.multiple_of(q_idx * tq, tq)
        x_q = x_b[:, pl.ds(qoff, tq)]                       # (C, tq) f32
        q_t = jnp.dot(wq_ref[...], x_q,
                      preferred_element_type=jnp.float32).astype(cdt)  # (C8, tq)

        def scores(koff):
            k_blk = k_scr[:, pl.ds(koff, tk)]               # (C8, tk)
            v_blk = v_scr[:, pl.ds(koff, tk)]               # (C,  tk)
            # Key-major scores keep the softmax statistics lane-dense (1, tq).
            s_t = lax.dot_general(k_blk, q_t, (((0,), (0,)), ((), ())),
                                  preferred_element_type=jnp.float32)  # (tk, tq)
            if need_mask:
                kpos = koff + lax.broadcasted_iota(jnp.int32, (tk, tq), 0)
                s_t = jnp.where(kpos < hw, s_t, -jnp.inf)
            return s_t, v_blk

        # Block 0 initializes the online-softmax state (no alpha rescale).
        s0, v0 = scores(0)
        m = jnp.max(s0, axis=0, keepdims=True)                          # (1, tq)
        p0 = jnp.exp((s0 - m).astype(edt))
        l = jnp.sum(p0.astype(jnp.float32), axis=0, keepdims=True)      # (1, tq)
        acc = jnp.dot(v0, p0.astype(cdt),
                      preferred_element_type=jnp.float32)               # (C, tq)

        def body(kb, carry):
            m, l, acc = carry
            s_t, v_blk = scores(pl.multiple_of(kb * tk, tk))
            m_new = jnp.maximum(m, jnp.max(s_t, axis=0, keepdims=True))
            alpha = jnp.exp(m - m_new)
            p_t = jnp.exp((s_t - m_new).astype(edt))
            l = alpha * l + jnp.sum(p_t.astype(jnp.float32), axis=0,
                                    keepdims=True)
            acc = alpha * acc + jnp.dot(v_blk, p_t.astype(cdt),
                                        preferred_element_type=jnp.float32)
            return m_new, l, acc

        if nk > 1:
            m, l, acc = lax.fori_loop(1, nk, body, (m, l, acc))

        # Fuse both branches + both residuals: gamma_c*CA + gamma_p*PA + 2*x.
        ca = jnp.dot(attn_c_ref[...], x_q,
                     preferred_element_type=jnp.float32)                # (C, tq)
        pa = acc * (gamma_p * pl.reciprocal(l, approx=True))
        o_ref[0] = (ca + pa + 2.0 * x_q).astype(o_ref.dtype)

    return kernel


def danet_attention(x, wq, wk, wv, gammas, *, tq=256, tk=512,
                    compute_dtype=jnp.bfloat16, exp_dtype=None):
    """x: (B, C, H, W) f32; wq/wk: (C//8, C); wv: (C, C); gammas: (2,) f32."""
    B, C, H, W = x.shape
    HW = H * W
    C8 = wq.shape[0]
    assert wk.shape == (C8, C) and wv.shape == (C, C)

    if exp_dtype is None:
        exp_dtype = _default_exp_dtype()
    cdt = jnp.dtype(compute_dtype)
    edt = jnp.dtype(exp_dtype)

    # Pad the spatial axis up to a lane-dense multiple of 128; padded key
    # positions are masked out of the position softmax inside the kernel.
    hw_pad = ((HW + 127) // 128) * 128
    tq = _pick_tile(hw_pad, tq)
    tk = _pick_tile(hw_pad, tk)
    nq = hw_pad // tq

    xf = x.reshape(B, C, HW).astype(jnp.float32)
    if hw_pad != HW:
        xf = jnp.pad(xf, ((0, 0), (0, 0), (0, hw_pad - HW)))
    wq_f = wq.astype(jnp.float32)
    wk_f = wk.astype(jnp.float32)
    wv_f = wv.astype(jnp.float32)
    gammas = gammas.astype(jnp.float32).reshape(2)

    # VMEM budget from the actual resident set, checked against the chip cap.
    esz = cdt.itemsize
    est = (2 * C * hw_pad * 4                    # x per batch (double-buffered)
           + 2 * C * tq * 4                      # output double buffer
           + 2 * (2 * C8 + C) * C * 4            # wq / wk / wv double buffers
           + 2 * C * C * 4                       # energy temp + channel-attn scratch
           + (C8 + C) * hw_pad * (esz + 4)       # K / V scratch + f32 projection temps
           + tk * tq * (4 + edt.itemsize + esz)  # s_t / p_t temporaries
           + 3 * C * tq * 4                      # acc carry + ca / pa temps
           + C8 * tq * (esz + 4))                # q-tile projection
    try:
        vmem_cap = pltpu.get_tpu_info().vmem_capacity_bytes
    except Exception:
        vmem_cap = 64 * 1024 * 1024
    vmem_limit = int(min(max(est + (8 << 20), 32 << 20), int(0.9 * vmem_cap)))
    if est > vmem_limit:
        raise ValueError(
            f"DANet kernel resident set (~{est >> 20} MiB) exceeds the VMEM "
            f"budget ({vmem_limit >> 20} MiB); reduce HW/C or use the HBM K/V "
            f"fallback (see TODO).")

    kernel = _make_danet_kernel(tq, tk, HW, hw_pad, cdt, edt)
    out = pl.pallas_call(
        kernel,
        out_shape=jax.ShapeDtypeStruct((B, C, hw_pad), jnp.float32),
        grid=(B, nq),
        in_specs=[
            pl.BlockSpec(memory_space=pltpu.MemorySpace.SMEM),        # gammas
            pl.BlockSpec((1, C, hw_pad), lambda b, q: (b, 0, 0)),     # x (full HW/batch)
            pl.BlockSpec((C8, C), lambda b, q: (0, 0)),               # Wq
            pl.BlockSpec((C8, C), lambda b, q: (0, 0)),               # Wk
            pl.BlockSpec((C, C), lambda b, q: (0, 0)),                # Wv
        ],
        out_specs=pl.BlockSpec((1, C, tq), lambda b, q: (b, 0, q)),
        scratch_shapes=[
            pltpu.VMEM((C, C), jnp.float32),    # gamma_c-scaled channel attention
            pltpu.VMEM((C8, hw_pad), cdt),      # projected keys
            pltpu.VMEM((C, hw_pad), cdt),       # projected values
        ],
        compiler_params=pltpu.CompilerParams(
            dimension_semantics=("parallel", "arbitrary"),
            vmem_limit_bytes=vmem_limit),
    )(gammas, xf, wq_f, wk_f, wv_f)

    if hw_pad != HW:
        out = out[:, :, :HW]
    return out.reshape(B, C, H, W)


def danet_reference(x, wq, wk, wv, gammas, pos_dtype=None):
    """Pure-JAX reference matching the PyTorch forward.  `pos_dtype` optionally
    rounds the position-attention Q/K/V projections to the kernel's MXU
    operand dtype (the channel branch stays f32, like the kernel)."""
    b, c, h, w = x.shape
    xf = x.reshape(b, c, h * w).astype(jnp.float32)
    gc, gp = gammas[0], gammas[1]

    # ChannelAttention
    energy = jnp.einsum('bcn,bdn->bcd', xf, xf)
    energy = jnp.max(energy, axis=-1, keepdims=True) - energy
    attn = jax.nn.softmax(energy, axis=-1)
    ca = jnp.einsum('bcd,bdn->bcn', attn, xf)
    ca_out = gc * ca + xf

    # PositionAttention (1x1 convs without bias == channel matmuls)
    q = jnp.einsum('oc,bcn->bon', wq, xf)
    k = jnp.einsum('oc,bcn->bon', wk, xf)
    v = jnp.einsum('oc,bcn->bon', wv, xf)
    if pos_dtype is not None:
        q = q.astype(pos_dtype).astype(jnp.float32)
        k = k.astype(pos_dtype).astype(jnp.float32)
        v = v.astype(pos_dtype).astype(jnp.float32)
    ep = jnp.einsum('bon,bom->bnm', q, k)
    ap = jax.nn.softmax(ep, axis=-1)
    pa = jnp.einsum('bcm,bnm->bcn', v, ap)
    pa_out = gp * pa + xf

    return (ca_out + pa_out).reshape(b, c, h, w)


if __name__ == "__main__":
    B, C, H, W = 2, 64, 16, 16      # HW = 256
    C8 = C // 8

    key = jax.random.PRNGKey(0)
    kx, kq, kk, kv = jax.random.split(key, 4)
    x = jax.random.normal(kx, (B, C, H, W), dtype=jnp.float32)
    wq = jax.random.normal(kq, (C8, C), dtype=jnp.float32) * 0.1
    wk = jax.random.normal(kk, (C8, C), dtype=jnp.float32) * 0.1
    wv = jax.random.normal(kv, (C, C), dtype=jnp.float32) * 0.1
    # PyTorch initializes both gammas to 0 (which would zero the attention
    # branches); use nonzero deterministic values so the hot path is exercised.
    gammas = jnp.array([0.5, 0.3], dtype=jnp.float32)

    # 1) f32 MXU + f32 exp, small tiles (exercises multiple q tiles and the
    #    in-kernel key loop) vs. the PyTorch-equivalent f32 reference.
    out_f32 = jax.block_until_ready(
        danet_attention(x, wq, wk, wv, gammas, tq=128, tk=128,
                        compute_dtype=jnp.float32, exp_dtype=jnp.float32))
    ref_f32 = danet_reference(x, wq, wk, wv, gammas)
    np.testing.assert_allclose(np.asarray(out_f32), np.asarray(ref_f32),
                               rtol=2e-2, atol=2e-2)

    # 2) Default path (bf16 MXU operands in the flash loop; bf16 exp on
    #    v6e/v7x) vs. a reference with matching Q/K/V rounding.
    out_def = jax.block_until_ready(danet_attention(x, wq, wk, wv, gammas))
    ref_def = danet_reference(x, wq, wk, wv, gammas, pos_dtype=jnp.bfloat16)
    np.testing.assert_allclose(np.asarray(out_def), np.asarray(ref_def),
                               rtol=5e-2, atol=5e-2)

    # 3) Ragged spatial size: HW = 10*10 = 100 is padded to 128; padded keys
    #    are masked out of the position-attention softmax.
    Br, Cr, Hr, Wr = 1, 32, 10, 10
    kx2, kq2, kk2, kv2 = jax.random.split(jax.random.PRNGKey(1), 4)
    xr = jax.random.normal(kx2, (Br, Cr, Hr, Wr), dtype=jnp.float32)
    wqr = jax.random.normal(kq2, (Cr // 8, Cr), dtype=jnp.float32) * 0.1
    wkr = jax.random.normal(kk2, (Cr // 8, Cr), dtype=jnp.float32) * 0.1
    wvr = jax.random.normal(kv2, (Cr, Cr), dtype=jnp.float32) * 0.1
    out_r = jax.block_until_ready(
        danet_attention(xr, wqr, wkr, wvr, gammas,
                        compute_dtype=jnp.float32, exp_dtype=jnp.float32))
    ref_r = danet_reference(xr, wqr, wkr, wvr, gammas)
    np.testing.assert_allclose(np.asarray(out_r), np.asarray(ref_r),
                               rtol=2e-2, atol=2e-2)

    print("KERNEL_OK")
</pallas_src>

<mosaic_0001>
module attributes {stable_mosaic.version = 11 : i64} {
  func.func @kernel(%arg0: i32, %arg1: i32, %arg2: memref<2xf32, #tpu.memory_space<smem>>, %arg3: memref<1x64x256xf32, #tpu.memory_space<vmem>>, %arg4: memref<8x64xf32, #tpu.memory_space<vmem>>, %arg5: memref<8x64xf32, #tpu.memory_space<vmem>>, %arg6: memref<64x64xf32, #tpu.memory_space<vmem>>, %arg7: memref<1x64x128xf32, #tpu.memory_space<vmem>>, %arg8: memref<64x64xf32, #tpu.memory_space<vmem>>, %arg9: memref<8x256xf32, #tpu.memory_space<vmem>>, %arg10: memref<64x256xf32, #tpu.memory_space<vmem>>) attributes {dimension_semantics = [#tpu.dimension_semantics<parallel>, #tpu.dimension_semantics<arbitrary>], iteration_bounds = array<i64: 2, 2>, scalar_prefetch = 0 : i64, scratch_operands = 3 : i64, tpu.core_type = #tpu.core_type<tc>, window_params = [{transform_indices = @transform_0, window_bounds = array<i64: 2>}, {transform_indices = @transform_1, window_bounds = array<i64: 1, 64, 256>}, {pipeline_mode = #tpu.pipeline_mode<synchronous>, transform_indices = @transform_2, window_bounds = array<i64: 8, 64>}, {pipeline_mode = #tpu.pipeline_mode<synchronous>, transform_indices = @transform_3, window_bounds = array<i64: 8, 64>}, {pipeline_mode = #tpu.pipeline_mode<synchronous>, transform_indices = @transform_4, window_bounds = array<i64: 64, 64>}, {transform_indices = @transform_5, window_bounds = array<i64: 1, 64, 128>}]} {
    %c0 = arith.constant 0 : index
    %0 = memref.load %arg2[%c0] : memref<2xf32, #tpu.memory_space<smem>>
    %c1 = arith.constant 1 : index
    %1 = memref.load %arg2[%c1] : memref<2xf32, #tpu.memory_space<smem>>
    %c0_i32 = arith.constant 0 : i32
    %2 = arith.cmpi eq, %arg1, %c0_i32 : i32
    %3 = arith.extui %2 : i1 to i32
    %c0_i32_0 = arith.constant 0 : i32
    %c0_i32_1 = arith.constant 0 : i32
    %4 = arith.cmpi ne, %3, %c0_i32_1 : i32
    scf.if %4 {
      %61 = arith.index_cast %c0_i32_0 : i32 to index
      %c0_31 = arith.constant 0 : index
      %c0_32 = arith.constant 0 : index
      %62 = vector.load %arg3[%61, %c0_31, %c0_32] : memref<1x64x256xf32, #tpu.memory_space<vmem>>, vector<1x64x256xf32>
      %63 = vector.shape_cast %62 : vector<1x64x256xf32> to vector<64x256xf32>
      %cst_33 = arith.constant dense<0.000000e+00> : vector<64x64xf32>
      %64 = tpu.matmul %63, %63, %cst_33 {dimension_numbers = #tpu.dot_dimension_numbers<[1], [1], [0], [0], [0, 0, 1, 0], [], []>} : vector<64x256xf32>, vector<64x256xf32>, vector<64x64xf32> -> vector<64x64xf32>
      %cst_34 = arith.constant dense<0x7F800000> : vector<64xf32>
      %65 = vector.multi_reduction <minimumf>, %64, %cst_34 [1] : vector<64x64xf32> to vector<64xf32>
      %66 = vector.shape_cast %65 : vector<64xf32> to vector<64x1xf32>
      %67 = vector.broadcast %66 : vector<64x1xf32> to vector<64x64xf32>
      %68 = arith.subf %67, %64 : vector<64x64xf32>
      %69 = math.exp %68 : vector<64x64xf32>
      %cst_35 = arith.constant dense<0.000000e+00> : vector<64xf32>
      %70 = vector.multi_reduction <add>, %69, %cst_35 [1] : vector<64x64xf32> to vector<64xf32>
      %71 = vector.shape_cast %70 : vector<64xf32> to vector<64x1xf32>
      %72 = tpu.reciprocal %71 {approx = true} : vector<64x1xf32> -> vector<64x1xf32>
      %73 = vector.broadcast %0 : f32 to vector<64x1xf32>
      %74 = arith.mulf %73, %72 : vector<64x1xf32>
      %75 = vector.broadcast %74 : vector<64x1xf32> to vector<64x64xf32>
      %76 = arith.mulf %69, %75 : vector<64x64xf32>
      %c0_36 = arith.constant 0 : index
      %c0_37 = arith.constant 0 : index
      %77 = vector.load %arg8[%c0_36, %c0_37] : memref<64x64xf32, #tpu.memory_space<vmem>>, vector<64x64xf32>
      tpu.vector_store %arg8[%c0_36, %c0_37], %76 {strides = array<i32>} : memref<64x64xf32, #tpu.memory_space<vmem>>, vector<64x64xf32>,
      %c0_38 = arith.constant 0 : index
      %c0_39 = arith.constant 0 : index
      %78 = vector.load %arg5[%c0_38, %c0_39] : memref<8x64xf32, #tpu.memory_space<vmem>>, vector<8x64xf32>
      %cst_40 = arith.constant dense<0.000000e+00> : vector<8x256xf32>
      %79 = tpu.matmul %78, %63, %cst_40 {dimension_numbers = #tpu.dot_dimension_numbers<[1], [0], [0], [1], [0, 0, 1, 1], [], []>} : vector<8x64xf32>, vector<64x256xf32>, vector<8x256xf32> -> vector<8x256xf32>
      %c0_41 = arith.constant 0 : index
      %c0_42 = arith.constant 0 : index
      %80 = vector.load %arg9[%c0_41, %c0_42] : memref<8x256xf32, #tpu.memory_space<vmem>>, vector<8x256xf32>
      tpu.vector_store %arg9[%c0_41, %c0_42], %79 {strides = array<i32>} : memref<8x256xf32, #tpu.memory_space<vmem>>, vector<8x256xf32>,
      %c0_43 = arith.constant 0 : index
      %c0_44 = arith.constant 0 : index
      %81 = vector.load %arg6[%c0_43, %c0_44] : memref<64x64xf32, #tpu.memory_space<vmem>>, vector<64x64xf32>
      %cst_45 = arith.constant dense<0.000000e+00> : vector<64x256xf32>
      %82 = tpu.matmul %81, %63, %cst_45 {dimension_numbers = #tpu.dot_dimension_numbers<[1], [0], [0], [1], [0, 0, 1, 1], [], []>} : vector<64x64xf32>, vector<64x256xf32>, vector<64x256xf32> -> vector<64x256xf32>
      %c0_46 = arith.constant 0 : index
      %c0_47 = arith.constant 0 : index
      %83 = vector.load %arg10[%c0_46, %c0_47] : memref<64x256xf32, #tpu.memory_space<vmem>>, vector<64x256xf32>
      tpu.vector_store %arg10[%c0_46, %c0_47], %82 {strides = array<i32>} : memref<64x256xf32, #tpu.memory_space<vmem>>, vector<64x256xf32>,
    } else {
    }
    %c128_i32 = arith.constant 128 : i32
    %5 = arith.muli %arg1, %c128_i32 : i32
    %6 = tpu.assume_multiple %5, 128 : i32
    %c0_i32_2 = arith.constant 0 : i32
    %c0_i32_3 = arith.constant 0 : i32
    %c0_i32_4 = arith.constant 0 : i32
    %7 = tpu.memref_slice %arg3[%c0_i32_2, %c0_i32_3, %c0_i32_4] : memref<1x64x256xf32, #tpu.memory_space<vmem>> -> memref<1x64x256xf32, #tpu.memory_space<vmem>>
    %8 = tpu.memref_squeeze %7 : memref<1x64x256xf32, #tpu.memory_space<vmem>> -> memref<64x256xf32, #tpu.memory_space<vmem>>
    %c0_5 = arith.constant 0 : index
    %9 = arith.index_cast %6 : i32 to index
    %10 = vector.load %8[%c0_5, %9] : memref<64x256xf32, #tpu.memory_space<vmem>>, vector<64x128xf32>
    %c0_6 = arith.constant 0 : index
    %c0_7 = arith.constant 0 : index
    %11 = vector.load %arg4[%c0_6, %c0_7] : memref<8x64xf32, #tpu.memory_space<vmem>>, vector<8x64xf32>
    %cst = arith.constant dense<0.000000e+00> : vector<8x128xf32>
    %12 = tpu.matmul %11, %10, %cst {dimension_numbers = #tpu.dot_dimension_numbers<[1], [0], [0], [1], [0, 0, 1, 1], [], []>} : vector<8x64xf32>, vector<64x128xf32>, vector<8x128xf32> -> vector<8x128xf32>
    %c0_8 = arith.constant 0 : index
    %c0_9 = arith.constant 0 : index
    %13 = vector.load %arg9[%c0_8, %c0_9] : memref<8x256xf32, #tpu.memory_space<vmem>>, vector<8x128xf32>
    %c0_10 = arith.constant 0 : index
    %c0_11 = arith.constant 0 : index
    %14 = vector.load %arg10[%c0_10, %c0_11] : memref<64x256xf32, #tpu.memory_space<vmem>>, vector<64x128xf32>
    %cst_12 = arith.constant dense<0.000000e+00> : vector<128x128xf32>
    %15 = tpu.matmul %13, %12, %cst_12 {dimension_numbers = #tpu.dot_dimension_numbers<[0], [0], [1], [1], [0, 1, 1, 1], [], []>} : vector<8x128xf32>, vector<8x128xf32>, vector<128x128xf32> -> vector<128x128xf32>
    %cst_13 = arith.constant dense<0xFF800000> : vector<128xf32>
    %16 = vector.multi_reduction <maximumf>, %15, %cst_13 [0] : vector<128x128xf32> to vector<128xf32>
    %17 = vector.shape_cast %16 : vector<128xf32> to vector<1x128xf32>
    %18 = vector.broadcast %17 : vector<1x128xf32> to vector<128x128xf32>
    %19 = arith.subf %15, %18 : vector<128x128xf32>
    %20 = math.exp %19 : vector<128x128xf32>
    %cst_14 = arith.constant dense<0.000000e+00> : vector<128xf32>
    %21 = vector.multi_reduction <add>, %20, %cst_14 [0] : vector<128x128xf32> to vector<128xf32>
    %22 = vector.shape_cast %21 : vector<128xf32> to vector<1x128xf32>
    %cst_15 = arith.constant dense<0.000000e+00> : vector<64x128xf32>
    %23 = tpu.matmul %14, %20, %cst_15 {dimension_numbers = #tpu.dot_dimension_numbers<[1], [0], [0], [1], [0, 0, 1, 1], [], []>} : vector<64x128xf32>, vector<128x128xf32>, vector<64x128xf32> -> vector<64x128xf32>
    %c1_i32 = arith.constant 1 : i32
    %c128_i32_16 = arith.constant 128 : i32
    %24 = arith.muli %c1_i32, %c128_i32_16 : i32
    %25 = tpu.assume_multiple %24, 128 : i32
    %c0_17 = arith.constant 0 : index
    %26 = arith.index_cast %25 : i32 to index
    %27 = vector.load %arg9[%c0_17, %26] : memref<8x256xf32, #tpu.memory_space<vmem>>, vector<8x128xf32>
    %c0_18 = arith.constant 0 : index
    %28 = arith.index_cast %25 : i32 to index
    %29 = vector.load %arg10[%c0_18, %28] : memref<64x256xf32, #tpu.memory_space<vmem>>, vector<64x128xf32>
    %cst_19 = arith.constant dense<0.000000e+00> : vector<128x128xf32>
    %30 = tpu.matmul %27, %12, %cst_19 {dimension_numbers = #tpu.dot_dimension_numbers<[0], [0], [1], [1], [0, 1, 1, 1], [], []>} : vector<8x128xf32>, vector<8x128xf32>, vector<128x128xf32> -> vector<128x128xf32>
    %cst_20 = arith.constant dense<0xFF800000> : vector<128xf32>
    %31 = vector.multi_reduction <maximumf>, %30, %cst_20 [0] : vector<128x128xf32> to vector<128xf32>
    %32 = vector.shape_cast %31 : vector<128xf32> to vector<1x128xf32>
    %33 = arith.maximumf %17, %32 : vector<1x128xf32>
    %34 = arith.subf %17, %33 : vector<1x128xf32>
    %35 = math.exp %34 : vector<1x128xf32>
    %36 = vector.broadcast %33 : vector<1x128xf32> to vector<128x128xf32>
    %37 = arith.subf %30, %36 : vector<128x128xf32>
    %38 = math.exp %37 : vector<128x128xf32>
    %39 = arith.mulf %35, %22 : vector<1x128xf32>
    %cst_21 = arith.constant dense<0.000000e+00> : vector<128xf32>
    %40 = vector.multi_reduction <add>, %38, %cst_21 [0] : vector<128x128xf32> to vector<128xf32>
    %41 = vector.shape_cast %40 : vector<128xf32> to vector<1x128xf32>
    %42 = arith.addf %39, %41 : vector<1x128xf32>
    %43 = vector.broadcast %35 : vector<1x128xf32> to vector<64x128xf32>
    %44 = arith.mulf %43, %23 : vector<64x128xf32>
    %cst_22 = arith.constant dense<0.000000e+00> : vector<64x128xf32>
    %45 = tpu.matmul %29, %38, %cst_22 {dimension_numbers = #tpu.dot_dimension_numbers<[1], [0], [0], [1], [0, 0, 1, 1], [], []>} : vector<64x128xf32>, vector<128x128xf32>, vector<64x128xf32> -> vector<64x128xf32>
    %46 = arith.addf %44, %45 : vector<64x128xf32>
    %c1_i32_23 = arith.constant 1 : i32
    %c0_24 = arith.constant 0 : index
    %c0_25 = arith.constant 0 : index
    %47 = vector.load %arg8[%c0_24, %c0_25] : memref<64x64xf32, #tpu.memory_space<vmem>>, vector<64x64xf32>
    %cst_26 = arith.constant dense<0.000000e+00> : vector<64x128xf32>
    %48 = tpu.matmul %47, %10, %cst_26 {dimension_numbers = #tpu.dot_dimension_numbers<[1], [0], [0], [1], [0, 0, 1, 1], [], []>} : vector<64x64xf32>, vector<64x128xf32>, vector<64x128xf32> -> vector<64x128xf32>
    %49 = tpu.reciprocal %42 {approx = true} : vector<1x128xf32> -> vector<1x128xf32>
    %50 = vector.broadcast %1 : f32 to vector<1x128xf32>
    %51 = arith.mulf %50, %49 : vector<1x128xf32>
    %52 = vector.broadcast %51 : vector<1x128xf32> to vector<64x128xf32>
    %53 = arith.mulf %46, %52 : vector<64x128xf32>
    %54 = arith.addf %48, %53 : vector<64x128xf32>
    %cst_27 = arith.constant 2.000000e+00 : f32
    %55 = vector.broadcast %cst_27 : f32 to vector<64x128xf32>
    %56 = arith.mulf %55, %10 : vector<64x128xf32>
    %57 = arith.addf %54, %56 : vector<64x128xf32>
    %c0_28 = arith.constant 0 : index
    %c0_29 = arith.constant 0 : index
    %c0_30 = arith.constant 0 : index
    %58 = vector.load %arg7[%c0_28, %c0_29, %c0_30] : memref<1x64x128xf32, #tpu.memory_space<vmem>>, vector<1x64x128xf32>
    %59 = vector.shape_cast %58 : vector<1x64x128xf32> to vector<64x128xf32>
    %60 = vector.shape_cast %57 : vector<64x128xf32> to vector<1x64x128xf32>
    tpu.vector_store %arg7[%c0_28, %c0_29, %c0_30], %60 {strides = array<i32>} : memref<1x64x128xf32, #tpu.memory_space<vmem>>, vector<1x64x128xf32>,
    return
  }
  func.func @transform_0(%arg0: i32, %arg1: i32) -> i32 {
    %c0_i32 = arith.constant 0 : i32
    %c0_i32_0 = arith.constant 0 : i32
    return %c0_i32 : i32
  }
  func.func @transform_1(%arg0: i32, %arg1: i32) -> (i32, i32, i32) {
    %c0_i32 = arith.constant 0 : i32
    %c0_i32_0 = arith.constant 0 : i32
    %c0_i32_1 = arith.constant 0 : i32
    return %arg0, %c0_i32, %c0_i32_0 : i32, i32, i32
  }
  func.func @transform_2(%arg0: i32, %arg1: i32) -> (i32, i32) {
    %c0_i32 = arith.constant 0 : i32
    %c0_i32_0 = arith.constant 0 : i32
    %c0_i32_1 = arith.constant 0 : i32
    return %c0_i32, %c0_i32_0 : i32, i32
  }
  func.func @transform_3(%arg0: i32, %arg1: i32) -> (i32, i32) {
    %c0_i32 = arith.constant 0 : i32
    %c0_i32_0 = arith.constant 0 : i32
    %c0_i32_1 = arith.constant 0 : i32
    return %c0_i32, %c0_i32_0 : i32, i32
  }
  func.func @transform_4(%arg0: i32, %arg1: i32) -> (i32, i32) {
    %c0_i32 = arith.constant 0 : i32
    %c0_i32_0 = arith.constant 0 : i32
    %c0_i32_1 = arith.constant 0 : i32
    return %c0_i32, %c0_i32_0 : i32, i32
  }
  func.func @transform_5(%arg0: i32, %arg1: i32) -> (i32, i32, i32) {
    %c0_i32 = arith.constant 0 : i32
    %c0_i32_0 = arith.constant 0 : i32
    return %arg0, %c0_i32, %arg1 : i32, i32, i32
  }
}

</mosaic_0001>

<llo_original>
// kernel: tpu_custom_call.1
$region0: #{tpu_custom_call.1}
  #allocation0 [shape = 'u32[]', space=smem, size = 0x4, offset = 0x4, fixed_abs, tag = 'smem constant byte address 0x4 - core index']
  #allocation1 [shape = 'u32[144,128]{1,0:T(1,128)}', space=vmem, size = 0x12000, scoped, tag = 'internal scratch']
  #allocation2 [shape = 'f32[64,64]{1,0:T(8,128)}', space=vmem, size = 0x8000, scoped, tag = 'scratch operand']
  #allocation3 [shape = 'f32[8,256]{1,0:T(8,128)}', space=vmem, size = 0x2000, scoped, tag = 'scratch operand']
  #allocation4 [shape = 'f32[64,256]{1,0:T(8,128)}', space=vmem, size = 0x10000, scoped, tag = 'scratch operand']
  %s0 = inlined_call_operand.hbm [shape: f32[2], index: 0, kind: input, shape index: {}]
  %s1 = inlined_call_operand.hbm [shape: f32[2,64,256], index: 1, kind: input, shape index: {}]
  %s2 = inlined_call_operand.hbm [shape: f32[8,64], index: 2, kind: input, shape index: {}]
  %s3 = inlined_call_operand.hbm [shape: f32[8,64], index: 3, kind: input, shape index: {}]
  %s4 = inlined_call_operand.hbm [shape: f32[64,64], index: 4, kind: input, shape index: {}]
  %s5 = inlined_call_operand.hbm [shape: f32[2,64,256], index: 5, kind: output, shape index: {}]
  %s6 = sld [smem:[#allocation0]]
  $region77: #{tpu_custom_call.1} parent=0
    _
  %s8 = ssub.s32 1, %s6
  %s9 = scalar_select 0, %s8, %s6
  $region1: #{tpu_custom_call.1} parent=0
    #allocation5 [shape = 'u8[512]{0}', space=smem, size = 0x200, scoped, tag = 'input window, operand 0, single buffered']
    #allocation6 [shape = 's32[2]{0}', space=sflag, size = 0x8, scoped, tag = 'scoped memory for tpu_custom_call.1']
    #allocation7 [shape = 's32[2]{0}', space=sflag, size = 0x8, scoped, tag = 'scoped memory for tpu_custom_call.1']
    #allocation8 [shape = 's32[2]{0}', space=sflag, size = 0x8, scoped, tag = 'scoped memory for tpu_custom_call.1']
    #allocation9 [shape = 'u8[131072]{0}', space=vmem, size = 0x20000, scoped, tag = 'input window, operand 1']
    #allocation10 [shape = 'u8[4096]{0}', space=vmem, size = 0x1000, scoped, tag = 'input window, operand 2, single buffered']
    #allocation11 [shape = 's32[1]{0}', space=sflag, size = 0x4, scoped, tag = 'scoped memory for tpu_custom_call.1']
    #allocation12 [shape = 'u8[4096]{0}', space=vmem, size = 0x1000, scoped, tag = 'input window, operand 3, single buffered']
    #allocation13 [shape = 'u8[32768]{0}', space=vmem, size = 0x8000, scoped, tag = 'input window, operand 4, single buffered']
    #allocation14 [shape = 's32[1]{0}', space=sflag, size = 0x4, scoped, tag = 'scoped memory for tpu_custom_call.1']
    #allocation15 [shape = 'u8[65536]{0}', space=vmem, size = 0x10000, scoped, tag = 'output window, operand 0']
    %10 = vsyncpa [#allocation8], 0
    %11 = vsyncpa [#allocation6], 0
    %s12 = scalar_lea.sflag [#allocation6], 1
    %13 = vsyncpa %s12, 0
    %14 = vsyncpa [#allocation11], 0
    %15 = vsyncpa [#allocation14], 0
    %16 = vsyncpa [#allocation7], 0
    %s17 = scalar_lea.sflag [#allocation7], 1
    %18 = vsyncpa %s17, 0
    loop: start=0, step=1, limit=6
    $region2: #{tpu_custom_call.1} parent=1 // loop_pre_header
      _
    $region3: #{tpu_custom_call.1} parent=1 // loop_header
      %s20 = sphi 0, %s24
      %p21 = scmp.ge.s32.totalorder %s20, 6
      %s27 = sphi 0, %s39
      %s28 = sphi 0, %s35
      %s29 = sphi 0, %s27
      %s30 = sphi 0, %s28
      %s31 = sphi 0, %s29
      %s32 = sphi 0, %s30
      %s40 = sphi 0, %s40
      %s42 = sphi 0, %s40
      %s43 = sphi 0, %s42
      %s57 = sphi 0, %s43
      %s63 = sphi 0, %s65
      %s66 = sphi 0, %s63
      %s67 = sphi 0, %s66
      %s83 = sphi 0, %s67
      %s87 = sphi 0, %s87
      %s89 = sphi 0, %s87
      %s90 = sphi 0, %s89
      %s104 = sphi 0, %s90
      %s108 = sphi 0, %s108
      %s110 = sphi 0, %s108
      %s111 = sphi 0, %s110
      %s125 = sphi 0, %s111
      %s129 = sphi 0, %s129
      %s131 = sphi 0, %s129
      %s132 = sphi 0, %s131
      %s146 = sphi 0, %s132
      %s154 = sphi 0, %s156
      %s157 = sphi 0, %s154
      %s158 = sphi 0, %s157
      %s174 = sphi 0, %s158
    $region4: #{tpu_custom_call.1} parent=1 // loop_header_branch
      %23 = sbr.rel (%p21) target = $region8
    $region5: #{tpu_custom_call.1} parent=1 // loop_body
      %s25 = ssub.s32 %s20, 1
      %s26 = ssub.s32 %s20, 2
      %s33 = sadd.s32 1, %s28
      %p34 = scmp.ge.s32.totalorder %s33, 2
      %s35 = scalar_select %p34, 0, %s33
      %s36 = sadd.s32 1, %s27
      %s37 = scalar_select %p34, %s36, %s27
      %p38 = scmp.ge.s32.totalorder %s37, 2
      %s39 = scalar_select %p38, 0, %s37
      %s41 = sadd.s32 %s40, 1
      %p44 = scmp.eq.s32.totalorder %s20, 3
      %p45 = scmp.ne.s32.totalorder %s40, %s42
      %p46 = scmp.eq.s32.totalorder %s20, 0
      %p47 = por %p45, %p46
      %p48 = scmp.ne.s32.totalorder %s40, %s42
      %p49 = scmp.eq.s32.totalorder %s25, 3
      %p50 = por %p48, %p49
      %p51 = scmp.ne.s32.totalorder %s42, %s43
      %p52 = scmp.eq.s32.totalorder %s25, 0
      %p53 = por %p51, %p52
      %p54 = scmp.ne.s32.totalorder %s42, %s43
      %p55 = scmp.eq.s32.totalorder %s26, 3
      %p56 = por %p54, %p55
      %p58 = scmp.ne.s32.totalorder %s43, %s57
      %p59 = scmp.eq.s32.totalorder %s26, 0
      %p60 = por %p58, %p59
      %s61 = ssub.s32 %s27, %s39
      %p62 = scmp.eq.s32.totalorder %s61, 0
      %s64 = sadd.s32 %s63, 1
      %s65 = scalar_select %p62, %s63, %s64
      %p68 = pneg %p62
      %p69 = scmp.eq.s32.totalorder %s20, 3
      %p70 = por %p68, %p69
      %p71 = scmp.ne.s32.totalorder %s63, %s66
      %p72 = scmp.eq.s32.totalorder %s20, 0
      %p73 = por %p71, %p72
      %p74 = scmp.ne.s32.totalorder %s63, %s66
      %p75 = scmp.eq.s32.totalorder %s25, 3
      %p76 = por %p74, %p75
      %p77 = scmp.ne.s32.totalorder %s66, %s67
      %p78 = scmp.eq.s32.totalorder %s25, 0
      %p79 = por %p77, %p78
      %p80 = scmp.ne.s32.totalorder %s66, %s67
      %p81 = scmp.eq.s32.totalorder %s26, 3
      %p82 = por %p80, %p81
      %p84 = scmp.ne.s32.totalorder %s67, %s83
      %p85 = scmp.eq.s32.totalorder %s26, 0
      %p86 = por %p84, %p85
      %s88 = sadd.s32 %s87, 1
      %p91 = scmp.eq.s32.totalorder %s20, 3
      %p92 = scmp.ne.s32.totalorder %s87, %s89
      %p93 = scmp.eq.s32.totalorder %s20, 0
      %p94 = por %p92, %p93
      %p95 = scmp.ne.s32.totalorder %s87, %s89
      %p96 = scmp.eq.s32.totalorder %s25, 3
      %p97 = por %p95, %p96
      %p98 = scmp.ne.s32.totalorder %s89, %s90
      %p99 = scmp.eq.s32.totalorder %s25, 0
      %p100 = por %p98, %p99
      %p101 = scmp.ne.s32.totalorder %s89, %s90
      %p102 = scmp.eq.s32.totalorder %s26, 3
      %p103 = por %p101, %p102
      %p105 = scmp.ne.s32.totalorder %s90, %s104
      %p106 = scmp.eq.s32.totalorder %s26, 0
      %p107 = por %p105, %p106
      %s109 = sadd.s32 %s108, 1
      %p112 = scmp.eq.s32.totalorder %s20, 3
      %p113 = scmp.ne.s32.totalorder %s108, %s110
      %p114 = scmp.eq.s32.totalorder %s20, 0
      %p115 = por %p113, %p114
      %p116 = scmp.ne.s32.totalorder %s108, %s110
      %p117 = scmp.eq.s32.totalorder %s25, 3
      %p118 = por %p116, %p117
      %p119 = scmp.ne.s32.totalorder %s110, %s111
      %p120 = scmp.eq.s32.totalorder %s25, 0
      %p121 = por %p119, %p120
      %p122 = scmp.ne.s32.totalorder %s110, %s111
      %p123 = scmp.eq.s32.totalorder %s26, 3
      %p124 = por %p122, %p123
      %p126 = scmp.ne.s32.totalorder %s111, %s125
      %p127 = scmp.eq.s32.totalorder %s26, 0
      %p128 = por %p126, %p127
      %s130 = sadd.s32 %s129, 1
      %p133 = scmp.eq.s32.totalorder %s20, 3
      %p134 = scmp.ne.s32.totalorder %s129, %s131
      %p135 = scmp.eq.s32.totalorder %s20, 0
      %p136 = por %p134, %p135
      %p137 = scmp.ne.s32.totalorder %s129, %s131
      %p138 = scmp.eq.s32.totalorder %s25, 3
      %p139 = por %p137, %p138
      %p140 = scmp.ne.s32.totalorder %s131, %s132
      %p141 = scmp.eq.s32.totalorder %s25, 0
      %p142 = por %p140, %p141
      %p143 = scmp.ne.s32.totalorder %s131, %s132
      %p144 = scmp.eq.s32.totalorder %s26, 3
      %p145 = por %p143, %p144
      %p147 = scmp.ne.s32.totalorder %s132, %s146
      %p148 = scmp.eq.s32.totalorder %s26, 0
      %p149 = por %p147, %p148
      %s150 = ssub.s32 %s27, %s39
      %s151 = ssub.s32 %s28, %s35
      %s152 = sor.u32 %s150, %s151
      %p153 = scmp.eq.s32.totalorder %s152, 0
      %s155 = sadd.s32 %s154, 1
      %s156 = scalar_select %p153, %s154, %s155
      %p159 = pneg %p153
      %p160 = scmp.eq.s32.totalorder %s20, 3
      %p161 = por %p159, %p160
      %p162 = scmp.ne.s32.totalorder %s154, %s157
      %p163 = scmp.eq.s32.totalorder %s20, 0
      %p164 = por %p162, %p163
      %p165 = scmp.ne.s32.totalorder %s154, %s157
      %p166 = scmp.eq.s32.totalorder %s25, 3
      %p167 = por %p165, %p166
      %p168 = scmp.ne.s32.totalorder %s157, %s158
      %p169 = scmp.eq.s32.totalorder %s25, 0
      %p170 = por %p168, %p169
      %p171 = scmp.ne.s32.totalorder %s157, %s158
      %p172 = scmp.eq.s32.totalorder %s26, 3
      %p173 = por %p171, %p172
      %p175 = scmp.ne.s32.totalorder %s158, %s174
      %p176 = scmp.eq.s32.totalorder %s26, 0
      %p177 = por %p175, %p176
      %p178 = scmp.le.s32.totalorder 1, %s20
      %p179 = scmp.lt.s32.totalorder %s20, 5
      %p180 = pnand %p178, %p179
      %p181 = pneg %p180
      // Predicated region
      $region9: #{tpu_custom_call.1} parent=5 // pred_check
        _
      $region10: #{tpu_custom_call.1} parent=5 // pred_check_branch
        %183 = sbr.rel (%p180) target = $region12
      $region11: #{tpu_custom_call.1} parent=5 // pred_region
        %s184 = ssub.s32 %s20, 1
        // Predicated region
        $region13: #{tpu_custom_call.1} parent=11 // pred_check
          %p185 = pneg %p53
        $region14: #{tpu_custom_call.1} parent=11 // pred_check_branch
          %187 = sbr.rel (%p185) target = $region16
        $region15: #{tpu_custom_call.1} parent=11 // pred_region
          %s189 = ssub.s32 16, 16
          %190 = vsyncadd [#allocation8], %s189
          %193 = dma.hbm_to_smem %s0, 16, [#allocation5], [#allocation8]
        $region16: #{tpu_custom_call.1} parent=11 // pred_fallthru
          _
        // Predicated region
        $region17: #{tpu_custom_call.1} parent=11 // pred_check
          %p194 = pneg %p100
        $region18: #{tpu_custom_call.1} parent=11 // pred_check_branch
          %196 = sbr.rel (%p194) target = $region20
        $region19: #{tpu_custom_call.1} parent=11 // pred_region
          %s198 = ssub.s32 128, 128
          %199 = vsyncadd [#allocation11], %s198
          %s201 = sshll.u32 [#allocation10], 4
          %s202 = int_to_ptr.vmem [resolvable:$true] %s201
          %204 = dma.hbm_to_vmem [thread:$0]  %s2, 128, %s202, [#allocation11]
        $region20: #{tpu_custom_call.1} parent=11 // pred_fallthru
          _
        // Predicated region
        $region21: #{tpu_custom_call.1} parent=11 // pred_check
          %p205 = pneg %p121
        $region22: #{tpu_custom_call.1} parent=11 // pred_check_branch
          %207 = sbr.rel (%p205) target = $region24
        $region23: #{tpu_custom_call.1} parent=11 // pred_region
          %s209 = ssub.s32 128, 128
          %210 = vsyncadd [#allocation11], %s209
          %s212 = sshll.u32 [#allocation12], 4
          %s213 = int_to_ptr.vmem [resolvable:$true] %s212
          %215 = dma.hbm_to_vmem [thread:$0]  %s3, 128, %s213, [#allocation11]
        $region24: #{tpu_custom_call.1} parent=11 // pred_fallthru
          _
        // Predicated region
        $region25: #{tpu_custom_call.1} parent=11 // pred_check
          %p216 = pneg %p142
        $region26: #{tpu_custom_call.1} parent=11 // pred_check_branch
          %218 = sbr.rel (%p216) target = $region28
        $region27: #{tpu_custom_call.1} parent=11 // pred_region
          %s220 = ssub.s32 1024, 1024
          %221 = vsyncadd [#allocation14], %s220
          %s222 = sshll.u32 [#allocation13], 4
          %s223 = int_to_ptr.vmem [resolvable:$true] %s222
          %228 = dma.hbm_to_vmem [thread:$0]  %s4, 1024, %s223, [#allocation14], 128, 128, 8
        $region28: #{tpu_custom_call.1} parent=11 // pred_fallthru
          _
      $region12: #{tpu_custom_call.1} parent=5 // pred_fallthru
        _
      %p229 = scmp.lt.s32.totalorder %s20, 4
      // Predicated region
      $region29: #{tpu_custom_call.1} parent=5 // pred_check
        %p230 = pneg %p229
      $region30: #{tpu_custom_call.1} parent=5 // pred_check_branch
        %232 = sbr.rel (%p230) target = $region32
      $region31: #{tpu_custom_call.1} parent=5 // pred_region
        // Predicated region
        $region33: #{tpu_custom_call.1} parent=31 // pred_check
          %p233 = pneg %p73
        $region34: #{tpu_custom_call.1} parent=31 // pred_check_branch
          %235 = sbr.rel (%p233) target = $region36
        $region35: #{tpu_custom_call.1} parent=31 // pred_region
          %s236 = sand.u32 %s63, 1
          %s237 = scalar_lea.sflag [#allocation6], %s236
          %s238 = sand.u32 %s63, 1
          %s239 = smul.addr %s238, 128
          %s240 = scalar_lea.vmem [#allocation9], %s239
          %s242 = ssub.s32 2048, 2048
          %243 = vsyncadd %s237, %s242
          %s244 = smul.addr %s27, 16
          %s245 = smul.addr %s244, 128
          %s246 = scalar_lea.hbm %s1, %s245
          %s247 = sshll.u32 %s240, 4
          %s248 = int_to_ptr.vmem [resolvable:$true] %s247
          %253 = dma.hbm_to_vmem [thread:$0]  %s246, 2048, %s248, %s237, 256, 256, 16
        $region36: #{tpu_custom_call.1} parent=31 // pred_fallthru
          _
      $region32: #{tpu_custom_call.1} parent=5 // pred_fallthru
        _
      %p254 = scmp.le.s32.totalorder 1, %s20
      %p255 = scmp.lt.s32.totalorder %s20, 5
      %p256 = pnand %p254, %p255
      %p257 = pneg %p256
      // Predicated region
      $region37: #{tpu_custom_call.1} parent=5 // pred_check
        _
      $region38: #{tpu_custom_call.1} parent=5 // pred_check_branch
        %259 = sbr.rel (%p256) target = $region40
      $region39: #{tpu_custom_call.1} parent=5 // pred_region
        %s260 = ssub.s32 %s20, 1
        // Predicated region
        $region41: #{tpu_custom_call.1} parent=39 // pred_check
          %p261 = pneg %p53
        $region42: #{tpu_custom_call.1} parent=39 // pred_check_branch
          %263 = sbr.rel (%p261) target = $region44
        $region43: #{tpu_custom_call.1} parent=39 // pred_region
          %264 = dma.done [#allocation8], 16
        $region44: #{tpu_custom_call.1} parent=39 // pred_fallthru
          _
        %s265 = sand.u32 %s66, 1
        %s266 = scalar_lea.sflag [#allocation6], %s265
        %s267 = sand.u32 %s66, 1
        %s268 = smul.addr %s267, 128
        %s269 = scalar_lea.vmem [#allocation9], %s268
        // Predicated region
        $region45: #{tpu_custom_call.1} parent=39 // pred_check
          %p270 = pneg %p79
        $region46: #{tpu_custom_call.1} parent=39 // pred_check_branch
          %272 = sbr.rel (%p270) target = $region48
        $region47: #{tpu_custom_call.1} parent=39 // pred_region
          %273 = dma.done %s266, 2048
        $region48: #{tpu_custom_call.1} parent=39 // pred_fallthru
          _
        // Predicated region
        $region49: #{tpu_custom_call.1} parent=39 // pred_check
          %p274 = pneg %p100
        $region50: #{tpu_custom_call.1} parent=39 // pred_check_branch
          %276 = sbr.rel (%p274) target = $region52
        $region51: #{tpu_custom_call.1} parent=39 // pred_region
          %277 = dma.done [#allocation11], 128
        $region52: #{tpu_custom_call.1} parent=39 // pred_fallthru
          _
        // Predicated region
        $region53: #{tpu_custom_call.1} parent=39 // pred_check
          %p278 = pneg %p121
        $region54: #{tpu_custom_call.1} parent=39 // pred_check_branch
          %280 = sbr.rel (%p278) target = $region56
        $region55: #{tpu_custom_call.1} parent=39 // pred_region
          %281 = dma.done [#allocation11], 128
        $region56: #{tpu_custom_call.1} parent=39 // pred_fallthru
          _
        // Predicated region
        $region57: #{tpu_custom_call.1} parent=39 // pred_check
          %p282 = pneg %p142
        $region58: #{tpu_custom_call.1} parent=39 // pred_check_branch
          %284 = sbr.rel (%p282) target = $region60
        $region59: #{tpu_custom_call.1} parent=39 // pred_region
          %285 = dma.done [#allocation14], 1024
        $region60: #{tpu_custom_call.1} parent=39 // pred_fallthru
          _
        %286 = sfence
        %p287 = pneg %p53
        %p288 = pneg %p50
        %s289 = sand.u32 %s66, 1
        %s290 = scalar_lea.sflag [#allocation6], %s289
        %s291 = sand.u32 %s66, 1
        %s292 = smul.addr %s291, 128
        %s293 = scalar_lea.vmem [#allocation9], %s292
        %p294 = pneg %p79
        %p295 = pneg %p76
        %p296 = pneg %p100
        %p297 = pneg %p97
        %p298 = pneg %p121
        %p299 = pneg %p118
        %p300 = pneg %p142
        %p301 = pneg %p139
        %p302 = pneg %p170
        %p303 = pneg %p167
        %s304 = sand.u32 %s157, 1
        %s305 = scalar_lea.sflag [#allocation7], %s304
        %s306 = sand.u32 %s157, 1
        %s307 = smul.addr %s306, 64
        %s308 = scalar_lea.vmem [#allocation15], %s307
        %s309 = sld [smem:[#allocation5]]
        %s310 = sld [smem:[#allocation5 + $0x1]]
        %p311 = scmp.eq.s32.totalorder %s30, 0
        // Predicated region
        $region61: #{tpu_custom_call.1} parent=39 // pred_check
          %p312 = pneg %p311
        $region62: #{tpu_custom_call.1} parent=39 // pred_check_branch
          %314 = sbr.rel (%p312) target = $region64
        $region63: #{tpu_custom_call.1} parent=39 // pred_region
          %v315 = vld [vmem:[%s269] sm:$0xff]
          %v316 = vld [vmem:[%s269 + $0x8] sm:$0xff]
          %v317 = vld [vmem:[%s269 + $0x10] sm:$0xff]
          %v318 = vld [vmem:[%s269 + $0x18] sm:$0xff]
          %v319 = vld [vmem:[%s269 + $0x20] sm:$0xff]
          %v320 = vld [vmem:[%s269 + $0x28] sm:$0xff]
          %v321 = vld [vmem:[%s269 + $0x30] sm:$0xff]
          %v322 = vld [vmem:[%s269 + $0x38] sm:$0xff]
          %v323 = vld [vmem:[%s269 + $0x40] sm:$0xff]
          %v324 = vld [vmem:[%s269 + $0x48] sm:$0xff]
          %v325 = vld [vmem:[%s269 + $0x50] sm:$0xff]
          %v326 = vld [vmem:[%s269 + $0x58] sm:$0xff]
          %v327 = vld [vmem:[%s269 + $0x60] sm:$0xff]
          %v328 = vld [vmem:[%s269 + $0x68] sm:$0xff]
          %v329 = vld [vmem:[%s269 + $0x70] sm:$0xff]
          %v330 = vld [vmem:[%s269 + $0x78] sm:$0xff]
          %331 = vmatprep.subr.mxu0 0.0
          %332 = vmatpush1.xpose.msra.mxu0 0.0
          %333 = vmatprep.subr.mxu0 0.0
          %334 = vmatpush1.xpose.msra.mxu0 0.0
          %335 = vmatprep.subr.mxu0 0.0
          %336 = vmatpush1.xpose.msra.mxu0 0.0
          %337 = vmatprep.subr.mxu0 0.0
          %338 = vmatpush1.xpose.msra.mxu0 0.0
          %339 = vmatprep.subr.mxu0 0.0
          %340 = vmatpush1.xpose.msra.mxu0 0.0
          %341 = vmatprep.subr.mxu0 0.0
          %342 = vmatpush1.xpose.msra.mxu0 0.0
          %343 = vmatprep.subr.mxu0 0.0
          %344 = vmatpush1.xpose.msra.mxu0 0.0
          %345 = vmatprep.subr.mxu0 0.0
          %346 = vmatpush1.xpose.msra.mxu0 0.0
          %347 = vmatprep.subr.mxu0 %v330
          %348 = vmatpush1.xpose.msra.mxu0 %v329
          %349 = vmatprep.subr.mxu0 %v328
          %350 = vmatpush1.xpose.msra.mxu0 %v327
          %351 = vmatprep.subr.mxu0 %v326
          %352 = vmatpush1.xpose.msra.mxu0 %v325
          %353 = vmatprep.subr.mxu0 %v324
          %354 = vmatpush1.xpose.msra.mxu0 %v323
          %355 = vmatprep.subr.mxu0 %v322
          %356 = vmatpush1.xpose.msra.mxu0 %v321
          %357 = vmatprep.subr.mxu0 %v320
          %358 = vmatpush1.xpose.msra.mxu0 %v319
          %359 = vmatprep.subr.mxu0 %v318
          %360 = vmatpush1.xpose.msra.mxu0 %v317
          %361 = vmatprep.subr.mxu0 %v316
          %362 = vmatpush1.xpose.msra.mxu0 %v315
          %363 = vmatprep.subr.mxu0 0.0
          %364 = vmatpush2.xpose.msra.mxu0 0.0
          %365 = vmatprep.subr.mxu0 0.0
          %366 = vmatpush2.xpose.msra.mxu0 0.0
          %367 = vmatprep.subr.mxu0 0.0
          %368 = vmatpush2.xpose.msra.mxu0 0.0
          %369 = vmatprep.subr.mxu0 0.0
          %370 = vmatpush2.xpose.msra.mxu0 0.0
          %371 = vmatprep.subr.mxu0 0.0
          %372 = vmatpush2.xpose.msra.mxu0 0.0
          %373 = vmatprep.subr.mxu0 0.0
          %374 = vmatpush2.xpose.msra.mxu0 0.0
          %375 = vmatprep.subr.mxu0 0.0
          %376 = vmatpush2.xpose.msra.mxu0 0.0
          %377 = vmatprep.subr.mxu0 0.0
          %378 = vmatpush2.xpose.msra.mxu0 0.0
          %379 = vmatprep.subr.mxu0 0.0
          %380 = vmatpush2.xpose.msra.mxu0 0.0
          %381 = vmatprep.subr.mxu0 0.0
          %382 = vmatpush2.xpose.msra.mxu0 0.0
          %383 = vmatprep.subr.mxu0 0.0
          %384 = vmatpush2.xpose.msra.mxu0 0.0
          %385 = vmatprep.subr.mxu0 0.0
          %386 = vmatpush2.xpose.msra.mxu0 0.0
          %387 = vmatprep.subr.mxu0 0.0
          %388 = vmatpush2.xpose.msra.mxu0 0.0
          %389 = vmatprep.subr.mxu0 0.0
          %390 = vmatpush2.xpose.msra.mxu0 0.0
          %391 = vmatprep.subr.mxu0 0.0
          %392 = vmatpush2.xpose.msra.mxu0 0.0
          %393 = vmatprep.subr.mxu0 0.0
          %394 = vmatpush2.xpose.msra.mxu0 0.0
          %395 = vmatprep.mubr.f32.mxu0 %v316
          %396 = vmatmul.mubr.f32.gmra.mxu0 %v315
          %v397 = vpop.f32.mrf.mxu0
          %v398 = vadd.f32 0.0, %v397
          %v399 = vpop.f32.mrf.mxu0
          %400 = vmatprep.mubr.f32.mxu0 %v318
          %401 = vmatmul.mubr.f32.gmra.mxu0 %v317
          %v402 = vpop.f32.mrf.mxu0
          %v403 = vadd.f32 0.0, %v402
          %v404 = vpop.f32.mrf.mxu0
          %405 = vmatprep.mubr.f32.mxu0 %v320
          %406 = vmatmul.mubr.f32.gmra.mxu0 %v319
          %v407 = vpop.f32.mrf.mxu0
          %v408 = vadd.f32 0.0, %v407
          %v409 = vpop.f32.mrf.mxu0
          %410 = vmatprep.mubr.f32.mxu0 %v322
          %411 = vmatmul.mubr.f32.gmra.mxu0 %v321
          %v412 = vpop.f32.mrf.mxu0
          %v413 = vadd.f32 0.0, %v412
          %v414 = vpop.f32.mrf.mxu0
          %415 = vmatprep.mubr.f32.mxu0 %v324
          %416 = vmatmul.mubr.f32.gmra.mxu0 %v323
          %v417 = vpop.f32.mrf.mxu0
          %v418 = vadd.f32 0.0, %v417
          %v419 = vpop.f32.mrf.mxu0
          %420 = vmatprep.mubr.f32.mxu0 %v326
          %421 = vmatmul.mubr.f32.gmra.mxu0 %v325
          %v422 = vpop.f32.mrf.mxu0
          %v423 = vadd.f32 0.0, %v422
          %v424 = vpop.f32.mrf.mxu0
          %425 = vmatprep.mubr.f32.mxu0 %v328
          %426 = vmatmul.mubr.f32.gmra.mxu0 %v327
          %v427 = vpop.f32.mrf.mxu0
          %v428 = vadd.f32 0.0, %v427
          %v429 = vpop.f32.mrf.mxu0
          %430 = vmatprep.mubr.f32.mxu0 %v330
          %431 = vmatmul.mubr.f32.gmra.mxu0 %v329
          %v432 = vpop.f32.mrf.mxu0
          %v433 = vadd.f32 0.0, %v432
          %v434 = vpop.f32.mrf.mxu0
          %435 = vdwg.mxu0
          %vm436 = vcmask 523264
          %v437 = vsel %vm436, %v398, inf
          %438 = vmin.xlane.f32.xlu0 %v437
          %v439 = vpop.xlane.xlu0 %438
          %v440 = vsel %vm436, %v403, inf
          %441 = vmin.xlane.f32.xlu0 %v440
          %v442 = vpop.xlane.xlu0 %441
          %v443 = vsel %vm436, %v408, inf
          %444 = vmin.xlane.f32.xlu0 %v443
          %v445 = vpop.xlane.xlu0 %444
          %v446 = vsel %vm436, %v413, inf
          %447 = vmin.xlane.f32.xlu0 %v446
          %v448 = vpop.xlane.xlu0 %447
          %v449 = vsel %vm436, %v418, inf
          %450 = vmin.xlane.f32.xlu0 %v449
          %v451 = vpop.xlane.xlu0 %450
          %v452 = vsel %vm436, %v423, inf
          %453 = vmin.xlane.f32.xlu0 %v452
          %v454 = vpop.xlane.xlu0 %453
          %v455 = vsel %vm436, %v428, inf
          %456 = vmin.xlane.f32.xlu0 %v455
          %v457 = vpop.xlane.xlu0 %456
          %v458 = vsel %vm436, %v433, inf
          %459 = vmin.xlane.f32.xlu0 %v458
          %v460 = vpop.xlane.xlu0 %459
          %v461 = vsub.f32 %v439, %v398
          %v462 = vsub.f32 %v442, %v403
          %v463 = vsub.f32 %v445, %v408
          %v464 = vsub.f32 %v448, %v413
          %v465 = vsub.f32 %v451, %v418
          %v466 = vsub.f32 %v454, %v423
          %v467 = vsub.f32 %v457, %v428
          %v468 = vsub.f32 %v460, %v433
          %v469 = vmul.f32 %v461, 1.442695
          %v470 = vpow.pop %v469
          %v471 = vmul.f32 %v462, 1.442695
          %v472 = vpow.pop %v471
          %v473 = vmul.f32 %v463, 1.442695
          %v474 = vpow.pop %v473
          %v475 = vmul.f32 %v464, 1.442695
          %v476 = vpow.pop %v475
          %v477 = vmul.f32 %v465, 1.442695
          %v478 = vpow.pop %v477
          %v479 = vmul.f32 %v466, 1.442695
          %v480 = vpow.pop %v479
          %v481 = vmul.f32 %v467, 1.442695
          %v482 = vpow.pop %v481
          %v483 = vmul.f32 %v468, 1.442695
          %v484 = vpow.pop %v483
          %v485 = vsel %vm436, %v470, 0.0
          %486 = vadd.xlane.f32.xlu0 %v485
          %v487 = vpop.xlane.xlu0 %486
          %v488 = vsel %vm436, %v472, 0.0
          %489 = vadd.xlane.f32.xlu0 %v488
          %v490 = vpop.xlane.xlu0 %489
          %v491 = vsel %vm436, %v474, 0.0
          %492 = vadd.xlane.f32.xlu0 %v491
          %v493 = vpop.xlane.xlu0 %492
          %v494 = vsel %vm436, %v476, 0.0
          %495 = vadd.xlane.f32.xlu0 %v494
          %v496 = vpop.xlane.xlu0 %495
          %v497 = vsel %vm436, %v478, 0.0
          %498 = vadd.xlane.f32.xlu0 %v497
          %v499 = vpop.xlane.xlu0 %498
          %v500 = vsel %vm436, %v480, 0.0
          %501 = vadd.xlane.f32.xlu0 %v500
          %v502 = vpop.xlane.xlu0 %501
          %v503 = vsel %vm436, %v482, 0.0
          %504 = vadd.xlane.f32.xlu0 %v503
          %v505 = vpop.xlane.xlu0 %504
          %v506 = vsel %vm436, %v484, 0.0
          %507 = vadd.xlane.f32.xlu0 %v506
          %v508 = vpop.xlane.xlu0 %507
          %v509 = vrcp.pop %v487
          %v510 = vrcp.pop %v490
          %v511 = vrcp.pop %v493
          %v512 = vrcp.pop %v496
          %v513 = vrcp.pop %v499
          %v514 = vrcp.pop %v502
          %v515 = vrcp.pop %v505
          %v516 = vrcp.pop %v508
          %v517 = vstv %s309
          %v518 = vmul.f32 %v517, %v509
          %v519 = vmul.f32 %v517, %v510
          %v520 = vmul.f32 %v517, %v511
          %v521 = vmul.f32 %v517, %v512
          %v522 = vmul.f32 %v517, %v513
          %v523 = vmul.f32 %v517, %v514
          %v524 = vmul.f32 %v517, %v515
          %v525 = vmul.f32 %v517, %v516
          %v526 = vmul.f32 %v470, %v518
          %v527 = vmul.f32 %v472, %v519
          %v528 = vmul.f32 %v474, %v520
          %v529 = vmul.f32 %v476, %v521
          %v530 = vmul.f32 %v478, %v522
          %v531 = vmul.f32 %v480, %v523
          %v532 = vmul.f32 %v482, %v524
          %v533 = vmul.f32 %v484, %v525
          %534 = vst.msk [vmem:[#allocation2] sm:$0xff] %vm436, %v526
          %535 = vst.msk [vmem:[#allocation2 + $0x8] sm:$0xff] %vm436, %v527
          %536 = vst.msk [vmem:[#allocation2 + $0x10] sm:$0xff] %vm436, %v528
          %537 = vst.msk [vmem:[#allocation2 + $0x18] sm:$0xff] %vm436, %v529
          %538 = vst.msk [vmem:[#allocation2 + $0x20] sm:$0xff] %vm436, %v530
          %539 = vst.msk [vmem:[#allocation2 + $0x28] sm:$0xff] %vm436, %v531
          %540 = vst.msk [vmem:[#allocation2 + $0x30] sm:$0xff] %vm436, %v532
          %541 = vst.msk [vmem:[#allocation2 + $0x38] sm:$0xff] %vm436, %v533
          %v542 = vld [vmem:[#allocation12] sm:$0xff]
          %v544 = vsel %vm436, %v542, 0
          %546 = vmatprep.subr.mxu0 0.0
          %547 = vmatpush1.msra.mxu0 0.0
          %548 = vmatprep.subr.mxu0 0.0
          %549 = vmatpush1.msra.mxu0 0.0
          %550 = vmatprep.subr.mxu0 0.0
          %551 = vmatpush1.msra.mxu0 0.0
          %552 = vmatprep.subr.mxu0 0.0
          %553 = vmatpush1.msra.mxu0 0.0
          %554 = vmatprep.subr.mxu0 0.0
          %555 = vmatpush1.msra.mxu0 0.0
          %556 = vmatprep.subr.mxu0 0.0
          %557 = vmatpush1.msra.mxu0 0.0
          %558 = vmatprep.subr.mxu0 0.0
          %559 = vmatpush1.msra.mxu0 0.0
          %560 = vmatprep.subr.mxu0 0.0
          %561 = vmatpush1.msra.mxu0 0.0
          %562 = vmatprep.subr.mxu0 %v330
          %563 = vmatpush1.msra.mxu0 %v329
          %564 = vmatprep.subr.mxu0 %v328
          %565 = vmatpush1.msra.mxu0 %v327
          %566 = vmatprep.subr.mxu0 %v326
          %567 = vmatpush1.msra.mxu0 %v325
          %568 = vmatprep.subr.mxu0 %v324
          %569 = vmatpush1.msra.mxu0 %v323
          %570 = vmatprep.subr.mxu0 %v322
          %571 = vmatpush1.msra.mxu0 %v321
          %572 = vmatprep.subr.mxu0 %v320
          %573 = vmatpush1.msra.mxu0 %v319
          %574 = vmatprep.subr.mxu0 %v318
          %575 = vmatpush1.msra.mxu0 %v317
          %576 = vmatprep.subr.mxu0 %v316
          %577 = vmatpush1.msra.mxu0 %v315
          %578 = vmatprep.subr.mxu0 0.0
          %579 = vmatpush2.msra.mxu0 0.0
          %580 = vmatprep.subr.mxu0 0.0
          %581 = vmatpush2.msra.mxu0 0.0
          %582 = vmatprep.subr.mxu0 0.0
          %583 = vmatpush2.msra.mxu0 0.0
          %584 = vmatprep.subr.mxu0 0.0
          %585 = vmatpush2.msra.mxu0 0.0
          %586 = vmatprep.subr.mxu0 0.0
          %587 = vmatpush2.msra.mxu0 0.0
          %588 = vmatprep.subr.mxu0 0.0
          %589 = vmatpush2.msra.mxu0 0.0
          %590 = vmatprep.subr.mxu0 0.0
          %591 = vmatpush2.msra.mxu0 0.0
          %592 = vmatprep.subr.mxu0 0.0
          %593 = vmatpush2.msra.mxu0 0.0
          %594 = vmatprep.subr.mxu0 0.0
          %595 = vmatpush2.msra.mxu0 0.0
          %596 = vmatprep.subr.mxu0 0.0
          %597 = vmatpush2.msra.mxu0 0.0
          %598 = vmatprep.subr.mxu0 0.0
          %599 = vmatpush2.msra.mxu0 0.0
          %600 = vmatprep.subr.mxu0 0.0
          %601 = vmatpush2.msra.mxu0 0.0
          %602 = vmatprep.subr.mxu0 0.0
          %603 = vmatpush2.msra.mxu0 0.0
          %604 = vmatprep.subr.mxu0 0.0
          %605 = vmatpush2.msra.mxu0 0.0
          %606 = vmatprep.subr.mxu0 0.0
          %607 = vmatpush2.msra.mxu0 0.0
          %608 = vmatprep.subr.mxu0 0.0
          %609 = vmatpush2.msra.mxu0 0.0
          %610 = vmatprep.mubr.f32.mxu0 0.0
          %611 = vmatmul.mubr.f32.gmra.mxu0 %v544
          %v612 = vpop.f32.mrf.mxu0
          %v613 = vadd.f32 0.0, %v612
          %v614 = vpop.f32.mrf.mxu0
          %v615 = vadd.f32 0.0, %v614
          %616 = vdwg.mxu0
          %617 = vst [vmem:[#allocation3] sm:$0xff] %v613
          %618 = vst [vmem:[#allocation3 + $0x8] sm:$0xff] %v615
          %v619 = vld [vmem:[#allocation13] sm:$0xff]
          %v620 = vld [vmem:[#allocation13 + $0x8] sm:$0xff]
          %v621 = vld [vmem:[#allocation13 + $0x10] sm:$0xff]
          %v622 = vld [vmem:[#allocation13 + $0x18] sm:$0xff]
          %v623 = vld [vmem:[#allocation13 + $0x20] sm:$0xff]
          %v624 = vld [vmem:[#allocation13 + $0x28] sm:$0xff]
          %v625 = vld [vmem:[#allocation13 + $0x30] sm:$0xff]
          %v626 = vld [vmem:[#allocation13 + $0x38] sm:$0xff]
          %v628 = vsel %vm436, %v619, 0
          %v631 = vsel %vm436, %v620, 0
          %v634 = vsel %vm436, %v621, 0
          %v637 = vsel %vm436, %v622, 0
          %v640 = vsel %vm436, %v623, 0
          %v643 = vsel %vm436, %v624, 0
          %v646 = vsel %vm436, %v625, 0
          %v649 = vsel %vm436, %v626, 0
          %651 = vmatprep.subr.mxu0 0.0
          %652 = vmatpush1.msra.mxu0 0.0
          %653 = vmatprep.subr.mxu0 0.0
          %654 = vmatpush1.msra.mxu0 0.0
          %655 = vmatprep.subr.mxu0 0.0
          %656 = vmatpush1.msra.mxu0 0.0
          %657 = vmatprep.subr.mxu0 0.0
          %658 = vmatpush1.msra.mxu0 0.0
          %659 = vmatprep.subr.mxu0 0.0
          %660 = vmatpush1.msra.mxu0 0.0
          %661 = vmatprep.subr.mxu0 0.0
          %662 = vmatpush1.msra.mxu0 0.0
          %663 = vmatprep.subr.mxu0 0.0
          %664 = vmatpush1.msra.mxu0 0.0
          %665 = vmatprep.subr.mxu0 0.0
          %666 = vmatpush1.msra.mxu0 0.0
          %667 = vmatprep.subr.mxu0 %v330
          %668 = vmatpush1.msra.mxu0 %v329
          %669 = vmatprep.subr.mxu0 %v328
          %670 = vmatpush1.msra.mxu0 %v327
          %671 = vmatprep.subr.mxu0 %v326
          %672 = vmatpush1.msra.mxu0 %v325
          %673 = vmatprep.subr.mxu0 %v324
          %674 = vmatpush1.msra.mxu0 %v323
          %675 = vmatprep.subr.mxu0 %v322
          %676 = vmatpush1.msra.mxu0 %v321
          %677 = vmatprep.subr.mxu0 %v320
          %678 = vmatpush1.msra.mxu0 %v319
          %679 = vmatprep.subr.mxu0 %v318
          %680 = vmatpush1.msra.mxu0 %v317
          %681 = vmatprep.subr.mxu0 %v316
          %682 = vmatpush1.msra.mxu0 %v315
          %683 = vmatprep.subr.mxu0 0.0
          %684 = vmatpush2.msra.mxu0 0.0
          %685 = vmatprep.subr.mxu0 0.0
          %686 = vmatpush2.msra.mxu0 0.0
          %687 = vmatprep.subr.mxu0 0.0
          %688 = vmatpush2.msra.mxu0 0.0
          %689 = vmatprep.subr.mxu0 0.0
          %690 = vmatpush2.msra.mxu0 0.0
          %691 = vmatprep.subr.mxu0 0.0
          %692 = vmatpush2.msra.mxu0 0.0
          %693 = vmatprep.subr.mxu0 0.0
          %694 = vmatpush2.msra.mxu0 0.0
          %695 = vmatprep.subr.mxu0 0.0
          %696 = vmatpush2.msra.mxu0 0.0
          %697 = vmatprep.subr.mxu0 0.0
          %698 = vmatpush2.msra.mxu0 0.0
          %699 = vmatprep.subr.mxu0 0.0
          %700 = vmatpush2.msra.mxu0 0.0
          %701 = vmatprep.subr.mxu0 0.0
          %702 = vmatpush2.msra.mxu0 0.0
          %703 = vmatprep.subr.mxu0 0.0
          %704 = vmatpush2.msra.mxu0 0.0
          %705 = vmatprep.subr.mxu0 0.0
          %706 = vmatpush2.msra.mxu0 0.0
          %707 = vmatprep.subr.mxu0 0.0
          %708 = vmatpush2.msra.mxu0 0.0
          %709 = vmatprep.subr.mxu0 0.0
          %710 = vmatpush2.msra.mxu0 0.0
          %711 = vmatprep.subr.mxu0 0.0
          %712 = vmatpush2.msra.mxu0 0.0
          %713 = vmatprep.subr.mxu0 0.0
          %714 = vmatpush2.msra.mxu0 0.0
          %715 = vmatprep.mubr.f32.mxu0 0.0
          %716 = vmatmul.mubr.f32.gmra.mxu0 %v628
          %v717 = vpop.f32.mrf.mxu0
          %v718 = vadd.f32 0.0, %v717
          %v719 = vpop.f32.mrf.mxu0
          %v720 = vadd.f32 0.0, %v719
          %721 = vmatprep.mubr.f32.mxu0 0.0
          %722 = vmatmul.mubr.f32.gmra.mxu0 %v631
          %v723 = vpop.f32.mrf.mxu0
          %v724 = vadd.f32 0.0, %v723
          %v725 = vpop.f32.mrf.mxu0
          %v726 = vadd.f32 0.0, %v725
          %727 = vmatprep.mubr.f32.mxu0 0.0
          %728 = vmatmul.mubr.f32.gmra.mxu0 %v634
          %v729 = vpop.f32.mrf.mxu0
          %v730 = vadd.f32 0.0, %v729
          %v731 = vpop.f32.mrf.mxu0
          %v732 = vadd.f32 0.0, %v731
          %733 = vmatprep.mubr.f32.mxu0 0.0
          %734 = vmatmul.mubr.f32.gmra.mxu0 %v637
          %v735 = vpop.f32.mrf.mxu0
          %v736 = vadd.f32 0.0, %v735
          %v737 = vpop.f32.mrf.mxu0
          %v738 = vadd.f32 0.0, %v737
          %739 = vmatprep.mubr.f32.mxu0 0.0
          %740 = vmatmul.mubr.f32.gmra.mxu0 %v640
          %v741 = vpop.f32.mrf.mxu0
          %v742 = vadd.f32 0.0, %v741
          %v743 = vpop.f32.mrf.mxu0
          %v744 = vadd.f32 0.0, %v743
          %745 = vmatprep.mubr.f32.mxu0 0.0
          %746 = vmatmul.mubr.f32.gmra.mxu0 %v643
          %v747 = vpop.f32.mrf.mxu0
          %v748 = vadd.f32 0.0, %v747
          %v749 = vpop.f32.mrf.mxu0
          %v750 = vadd.f32 0.0, %v749
          %751 = vmatprep.mubr.f32.mxu0 0.0
          %752 = vmatmul.mubr.f32.gmra.mxu0 %v646
          %v753 = vpop.f32.mrf.mxu0
          %v754 = vadd.f32 0.0, %v753
          %v755 = vpop.f32.mrf.mxu0
          %v756 = vadd.f32 0.0, %v755
          %757 = vmatprep.mubr.f32.mxu0 0.0
          %758 = vmatmul.mubr.f32.gmra.mxu0 %v649
          %v759 = vpop.f32.mrf.mxu0
          %v760 = vadd.f32 0.0, %v759
          %v761 = vpop.f32.mrf.mxu0
          %v762 = vadd.f32 0.0, %v761
          %763 = vdwg.mxu0
          %764 = vst [vmem:[#allocation4] sm:$0xff] %v718
          %765 = vst [vmem:[#allocation4 + $0x8] sm:$0xff] %v720
          %766 = vst [vmem:[#allocation4 + $0x10] sm:$0xff] %v724
          %767 = vst [vmem:[#allocation4 + $0x18] sm:$0xff] %v726
          %768 = vst [vmem:[#allocation4 + $0x20] sm:$0xff] %v730
          %769 = vst [vmem:[#allocation4 + $0x28] sm:$0xff] %v732
          %770 = vst [vmem:[#allocation4 + $0x30] sm:$0xff] %v736
          %771 = vst [vmem:[#allocation4 + $0x38] sm:$0xff] %v738
          %772 = vst [vmem:[#allocation4 + $0x40] sm:$0xff] %v742
          %773 = vst [vmem:[#allocation4 + $0x48] sm:$0xff] %v744
          %774 = vst [vmem:[#allocation4 + $0x50] sm:$0xff] %v748
          %775 = vst [vmem:[#allocation4 + $0x58] sm:$0xff] %v750
          %776 = vst [vmem:[#allocation4 + $0x60] sm:$0xff] %v754
          %777 = vst [vmem:[#allocation4 + $0x68] sm:$0xff] %v756
          %778 = vst [vmem:[#allocation4 + $0x70] sm:$0xff] %v760
          %779 = vst [vmem:[#allocation4 + $0x78] sm:$0xff] %v762
        $region64: #{tpu_custom_call.1} parent=39 // pred_fallthru
          _
        %s780 = smul.u32 %s30, 128
        %s781 = sshra.s32 %s780, 7
        %s782 = sand.u32 %s780, 127
        %s783 = smul.addr %s781, 8
        %s784 = scalar_lea.vmem %s269, %s783 [#allocation9]
        %v785 = vld [vmem:[%s784] sm:$0xff]
        %v786 = vld [vmem:[%s784 + $0x10] sm:$0xff]
        %v787 = vld [vmem:[%s784 + $0x20] sm:$0xff]
        %v788 = vld [vmem:[%s784 + $0x30] sm:$0xff]
        %v789 = vld [vmem:[%s784 + $0x40] sm:$0xff]
        %v790 = vld [vmem:[%s784 + $0x50] sm:$0xff]
        %v791 = vld [vmem:[%s784 + $0x60] sm:$0xff]
        %v792 = vld [vmem:[%s784 + $0x70] sm:$0xff]
        %v793 = vld [vmem:[#allocation10] sm:$0xff]
        %vm794 = vcmask 523264
        %v796 = vsel %vm794, %v793, 0
        %798 = vmatprep.subr.mxu0 0.0
        %799 = vmatpush1.msra.mxu0 0.0
        %800 = vmatprep.subr.mxu0 0.0
        %801 = vmatpush1.msra.mxu0 0.0
        %802 = vmatprep.subr.mxu0 0.0
        %803 = vmatpush1.msra.mxu0 0.0
        %804 = vmatprep.subr.mxu0 0.0
        %805 = vmatpush1.msra.mxu0 0.0
        %806 = vmatprep.subr.mxu0 0.0
        %807 = vmatpush1.msra.mxu0 0.0
        %808 = vmatprep.subr.mxu0 0.0
        %809 = vmatpush1.msra.mxu0 0.0
        %810 = vmatprep.subr.mxu0 0.0
        %811 = vmatpush1.msra.mxu0 0.0
        %812 = vmatprep.subr.mxu0 0.0
        %813 = vmatpush1.msra.mxu0 0.0
        %814 = vmatprep.subr.mxu0 0.0
        %815 = vmatpush1.msra.mxu0 %v792
        %816 = vmatprep.subr.mxu0 0.0
        %817 = vmatpush1.msra.mxu0 %v791
        %818 = vmatprep.subr.mxu0 0.0
        %819 = vmatpush1.msra.mxu0 %v790
        %820 = vmatprep.subr.mxu0 0.0
        %821 = vmatpush1.msra.mxu0 %v789
        %822 = vmatprep.subr.mxu0 0.0
        %823 = vmatpush1.msra.mxu0 %v788
        %824 = vmatprep.subr.mxu0 0.0
        %825 = vmatpush1.msra.mxu0 %v787
        %826 = vmatprep.subr.mxu0 0.0
        %827 = vmatpush1.msra.mxu0 %v786
        %828 = vmatprep.subr.mxu0 0.0
        %829 = vmatpush1.msra.mxu0 %v785
        %830 = vmatprep.subr.mxu0 0.0
        %831 = vmatpush2.msra.mxu0 0.0
        %832 = vmatprep.subr.mxu0 0.0
        %833 = vmatpush2.msra.mxu0 0.0
        %834 = vmatprep.subr.mxu0 0.0
        %835 = vmatpush2.msra.mxu0 0.0
        %836 = vmatprep.subr.mxu0 0.0
        %837 = vmatpush2.msra.mxu0 0.0
        %838 = vmatprep.subr.mxu0 0.0
        %839 = vmatpush2.msra.mxu0 0.0
        %840 = vmatprep.subr.mxu0 0.0
        %841 = vmatpush2.msra.mxu0 0.0
        %842 = vmatprep.subr.mxu0 0.0
        %843 = vmatpush2.msra.mxu0 0.0
        %844 = vmatprep.subr.mxu0 0.0
        %845 = vmatpush2.msra.mxu0 0.0
        %846 = vmatprep.subr.mxu0 0.0
        %847 = vmatpush2.msra.mxu0 0.0
        %848 = vmatprep.subr.mxu0 0.0
        %849 = vmatpush2.msra.mxu0 0.0
        %850 = vmatprep.subr.mxu0 0.0
        %851 = vmatpush2.msra.mxu0 0.0
        %852 = vmatprep.subr.mxu0 0.0
        %853 = vmatpush2.msra.mxu0 0.0
        %854 = vmatprep.subr.mxu0 0.0
        %855 = vmatpush2.msra.mxu0 0.0
        %856 = vmatprep.subr.mxu0 0.0
        %857 = vmatpush2.msra.mxu0 0.0
        %858 = vmatprep.subr.mxu0 0.0
        %859 = vmatpush2.msra.mxu0 0.0
        %860 = vmatprep.subr.mxu0 0.0
        %861 = vmatpush2.msra.mxu0 0.0
        %862 = vmatprep.mubr.f32.mxu0 0.0
        %863 = vmatmul.mubr.f32.gmra.mxu0 %v796
        %v864 = vpop.f32.mrf.mxu0
        %v865 = vadd.f32 0.0, %v864
        %v866 = vpop.f32.mrf.mxu0
        %867 = vdwg.mxu0
        %v868 = vld [vmem:[#allocation3] sm:$0xff]
        %v869 = vld [vmem:[#allocation4] sm:$0xff]
        %v870 = vld [vmem:[#allocation4 + $0x10] sm:$0xff]
        %v871 = vld [vmem:[#allocation4 + $0x20] sm:$0xff]
        %v872 = vld [vmem:[#allocation4 + $0x30] sm:$0xff]
        %v873 = vld [vmem:[#allocation4 + $0x40] sm:$0xff]
        %v874 = vld [vmem:[#allocation4 + $0x50] sm:$0xff]
        %v875 = vld [vmem:[#allocation4 + $0x60] sm:$0xff]
        %v876 = vld [vmem:[#allocation4 + $0x70] sm:$0xff]
        %877 = vxpose.xlu0.b32.start [1/16] %v868, 128
        %878 = vxpose.xlu0.b32.cont [2/16] 0.0, 128
        %879 = vxpose.xlu0.b32.cont [3/16] 0.0, 128
        %880 = vxpose.xlu0.b32.cont [4/16] 0.0, 128
        %881 = vxpose.xlu0.b32.cont [5/16] 0.0, 128
        %882 = vxpose.xlu0.b32.cont [6/16] 0.0, 128
        %883 = vxpose.xlu0.b32.cont [7/16] 0.0, 128
        %884 = vxpose.xlu0.b32.cont [8/16] 0.0, 128
        %885 = vxpose.xlu0.b32.cont [9/16] 0.0, 128
        %886 = vxpose.xlu0.b32.cont [10/16] 0.0, 128
        %887 = vxpose.xlu0.b32.cont [11/16] 0.0, 128
        %888 = vxpose.xlu0.b32.cont [12/16] 0.0, 128
        %889 = vxpose.xlu0.b32.cont [13/16] 0.0, 128
        %890 = vxpose.xlu0.b32.cont [14/16] 0.0, 128
        %891 = vxpose.xlu0.b32.cont [15/16] 0.0, 128
        %892 = vxpose.xlu0.b32.end [16/16] 0.0, 128
        %v893 = vpop.trf.xlu0
        %v894 = vpop.trf.xlu0
        %v895 = vpop.trf.xlu0
        %v896 = vpop.trf.xlu0
        %v897 = vpop.trf.xlu0
        %v898 = vpop.trf.xlu0
        %v899 = vpop.trf.xlu0
        %v900 = vpop.trf.xlu0
        %v901 = vpop.trf.xlu0
        %v902 = vpop.trf.xlu0
        %v903 = vpop.trf.xlu0
        %v904 = vpop.trf.xlu0
        %v905 = vpop.trf.xlu0
        %v906 = vpop.trf.xlu0
        %v907 = vpop.trf.xlu0
        %v908 = vpop.trf.xlu0
        %vm909 = vcmask 64512
        %v911 = vsel %vm909, %v893, 0
        %v914 = vsel %vm909, %v894, 0
        %v917 = vsel %vm909, %v895, 0
        %v920 = vsel %vm909, %v896, 0
        %v923 = vsel %vm909, %v897, 0
        %v926 = vsel %vm909, %v898, 0
        %v929 = vsel %vm909, %v899, 0
        %v932 = vsel %vm909, %v900, 0
        %v935 = vsel %vm909, %v901, 0
        %v938 = vsel %vm909, %v902, 0
        %v941 = vsel %vm909, %v903, 0
        %v944 = vsel %vm909, %v904, 0
        %v947 = vsel %vm909, %v905, 0
        %v950 = vsel %vm909, %v906, 0
        %v953 = vsel %vm909, %v907, 0
        %v956 = vsel %vm909, %v908, 0
        %958 = vmatprep.subr.mxu0 0.0
        %959 = vmatpush1.msra.mxu0 0.0
        %960 = vmatprep.subr.mxu0 0.0
        %961 = vmatpush1.msra.mxu0 0.0
        %962 = vmatprep.subr.mxu0 0.0
        %963 = vmatpush1.msra.mxu0 0.0
        %964 = vmatprep.subr.mxu0 0.0
        %965 = vmatpush1.msra.mxu0 0.0
        %966 = vmatprep.subr.mxu0 0.0
        %967 = vmatpush1.msra.mxu0 0.0
        %968 = vmatprep.subr.mxu0 0.0
        %969 = vmatpush1.msra.mxu0 0.0
        %970 = vmatprep.subr.mxu0 0.0
        %971 = vmatpush1.msra.mxu0 0.0
        %972 = vmatprep.subr.mxu0 0.0
        %973 = vmatpush1.msra.mxu0 0.0
        %974 = vmatprep.subr.mxu0 0.0
        %975 = vmatpush1.msra.mxu0 0.0
        %976 = vmatprep.subr.mxu0 0.0
        %977 = vmatpush1.msra.mxu0 0.0
        %978 = vmatprep.subr.mxu0 0.0
        %979 = vmatpush1.msra.mxu0 0.0
        %980 = vmatprep.subr.mxu0 0.0
        %981 = vmatpush1.msra.mxu0 0.0
        %982 = vmatprep.subr.mxu0 0.0
        %983 = vmatpush1.msra.mxu0 0.0
        %984 = vmatprep.subr.mxu0 0.0
        %985 = vmatpush1.msra.mxu0 0.0
        %986 = vmatprep.subr.mxu0 0.0
        %987 = vmatpush1.msra.mxu0 0.0
        %988 = vmatprep.subr.mxu0 0.0
        %989 = vmatpush1.msra.mxu0 %v865
        %990 = vmatprep.subr.mxu0 0.0
        %991 = vmatpush2.msra.mxu0 0.0
        %992 = vmatprep.subr.mxu0 0.0
        %993 = vmatpush2.msra.mxu0 0.0
        %994 = vmatprep.subr.mxu0 0.0
        %995 = vmatpush2.msra.mxu0 0.0
        %996 = vmatprep.subr.mxu0 0.0
        %997 = vmatpush2.msra.mxu0 0.0
        %998 = vmatprep.subr.mxu0 0.0
        %999 = vmatpush2.msra.mxu0 0.0
        %1000 = vmatprep.subr.mxu0 0.0
        %1001 = vmatpush2.msra.mxu0 0.0
        %1002 = vmatprep.subr.mxu0 0.0
        %1003 = vmatpush2.msra.mxu0 0.0
        %1004 = vmatprep.subr.mxu0 0.0
        %1005 = vmatpush2.msra.mxu0 0.0
        %1006 = vmatprep.subr.mxu0 0.0
        %1007 = vmatpush2.msra.mxu0 0.0
        %1008 = vmatprep.subr.mxu0 0.0
        %1009 = vmatpush2.msra.mxu0 0.0
        %1010 = vmatprep.subr.mxu0 0.0
        %1011 = vmatpush2.msra.mxu0 0.0
        %1012 = vmatprep.subr.mxu0 0.0
        %1013 = vmatpush2.msra.mxu0 0.0
        %1014 = vmatprep.subr.mxu0 0.0
        %1015 = vmatpush2.msra.mxu0 0.0
        %1016 = vmatprep.subr.mxu0 0.0
        %1017 = vmatpush2.msra.mxu0 0.0
        %1018 = vmatprep.subr.mxu0 0.0
        %1019 = vmatpush2.msra.mxu0 0.0
        %1020 = vmatprep.subr.mxu0 0.0
        %1021 = vmatpush2.msra.mxu0 0.0
        %1022 = vmatprep.mubr.f32.mxu0 0.0
        %1023 = vmatmul.mubr.f32.gmra.mxu0 %v911
        %v1024 = vpop.f32.mrf.mxu0
        %v1025 = vadd.f32 0.0, %v1024
        %v1026 = vpop.f32.mrf.mxu0
        %1027 = vmatprep.mubr.f32.mxu0 0.0
        %1028 = vmatmul.mubr.f32.gmra.mxu0 %v914
        %v1029 = vpop.f32.mrf.mxu0
        %v1030 = vadd.f32 0.0, %v1029
        %v1031 = vpop.f32.mrf.mxu0
        %1032 = vmatprep.mubr.f32.mxu0 0.0
        %1033 = vmatmul.mubr.f32.gmra.mxu0 %v917
        %v1034 = vpop.f32.mrf.mxu0
        %v1035 = vadd.f32 0.0, %v1034
        %v1036 = vpop.f32.mrf.mxu0
        %1037 = vmatprep.mubr.f32.mxu0 0.0
        %1038 = vmatmul.mubr.f32.gmra.mxu0 %v920
        %v1039 = vpop.f32.mrf.mxu0
        %v1040 = vadd.f32 0.0, %v1039
        %v1041 = vpop.f32.mrf.mxu0
        %1042 = vmatprep.mubr.f32.mxu0 0.0
        %1043 = vmatmul.mubr.f32.gmra.mxu0 %v923
        %v1044 = vpop.f32.mrf.mxu0
        %v1045 = vadd.f32 0.0, %v1044
        %v1046 = vpop.f32.mrf.mxu0
        %1047 = vmatprep.mubr.f32.mxu0 0.0
        %1048 = vmatmul.mubr.f32.gmra.mxu0 %v926
        %v1049 = vpop.f32.mrf.mxu0
        %v1050 = vadd.f32 0.0, %v1049
        %v1051 = vpop.f32.mrf.mxu0
        %1052 = vmatprep.mubr.f32.mxu0 0.0
        %1053 = vmatmul.mubr.f32.gmra.mxu0 %v929
        %v1054 = vpop.f32.mrf.mxu0
        %v1055 = vadd.f32 0.0, %v1054
        %v1056 = vpop.f32.mrf.mxu0
        %1057 = vmatprep.mubr.f32.mxu0 0.0
        %1058 = vmatmul.mubr.f32.gmra.mxu0 %v932
        %v1059 = vpop.f32.mrf.mxu0
        %v1060 = vadd.f32 0.0, %v1059
        %v1061 = vpop.f32.mrf.mxu0
        %1062 = vmatprep.mubr.f32.mxu0 0.0
        %1063 = vmatmul.mubr.f32.gmra.mxu0 %v935
        %v1064 = vpop.f32.mrf.mxu0
        %v1065 = vadd.f32 0.0, %v1064
        %v1066 = vpop.f32.mrf.mxu0
        %1067 = vmatprep.mubr.f32.mxu0 0.0
        %1068 = vmatmul.mubr.f32.gmra.mxu0 %v938
        %v1069 = vpop.f32.mrf.mxu0
        %v1070 = vadd.f32 0.0, %v1069
        %v1071 = vpop.f32.mrf.mxu0
        %1072 = vmatprep.mubr.f32.mxu0 0.0
        %1073 = vmatmul.mubr.f32.gmra.mxu0 %v941
        %v1074 = vpop.f32.mrf.mxu0
        %v1075 = vadd.f32 0.0, %v1074
        %v1076 = vpop.f32.mrf.mxu0
        %1077 = vmatprep.mubr.f32.mxu0 0.0
        %1078 = vmatmul.mubr.f32.gmra.mxu0 %v944
        %v1079 = vpop.f32.mrf.mxu0
        %v1080 = vadd.f32 0.0, %v1079
        %v1081 = vpop.f32.mrf.mxu0
        %1082 = vmatprep.mubr.f32.mxu0 0.0
        %1083 = vmatmul.mubr.f32.gmra.mxu0 %v947
        %v1084 = vpop.f32.mrf.mxu0
        %v1085 = vadd.f32 0.0, %v1084
        %v1086 = vpop.f32.mrf.mxu0
        %1087 = vmatprep.mubr.f32.mxu0 0.0
        %1088 = vmatmul.mubr.f32.gmra.mxu0 %v950
        %v1089 = vpop.f32.mrf.mxu0
        %v1090 = vadd.f32 0.0, %v1089
        %v1091 = vpop.f32.mrf.mxu0
        %1092 = vmatprep.mubr.f32.mxu0 0.0
        %1093 = vmatmul.mubr.f32.gmra.mxu0 %v953
        %v1094 = vpop.f32.mrf.mxu0
        %v1095 = vadd.f32 0.0, %v1094
        %v1096 = vpop.f32.mrf.mxu0
        %1097 = vmatprep.mubr.f32.mxu0 0.0
        %1098 = vmatmul.mubr.f32.gmra.mxu0 %v956
        %v1099 = vpop.f32.mrf.mxu0
        %v1100 = vadd.f32 0.0, %v1099
        %v1101 = vpop.f32.mrf.mxu0
        %1102 = vdwg.mxu0
        %v1103 = vmax.f32 %v1025, %v1045
        %v1104 = vmax.f32 %v1030, %v1050
        %v1105 = vmax.f32 %v1035, %v1055
        %v1106 = vmax.f32 %v1040, %v1060
        %v1107 = vmax.f32 %v1103, %v1065
        %v1108 = vmax.f32 %v1104, %v1070
        %v1109 = vmax.f32 %v1105, %v1075
        %v1110 = vmax.f32 %v1106, %v1080
        %v1111 = vmax.f32 %v1107, %v1085
        %v1112 = vmax.f32 %v1108, %v1090
        %v1113 = vmax.f32 %v1109, %v1095
        %v1114 = vmax.f32 %v1110, %v1100
        %v1115 = vmax.f32 %v1111, %v1112
        %v1116 = vmax.f32 %v1113, %v1114
        %v1117 = vmax.f32 %v1115, %v1116
        %v1118 = vrot.slane %v1117, 4
        %v1119 = vmax.f32 %v1117, %v1118
        %v1120 = vrot.slane %v1119, 2
        %v1121 = vmax.f32 %v1119, %v1120
        %v1122 = vrot.slane %v1121, 1
        %v1123 = vmax.f32 %v1121, %v1122
        %v1124 = vsub.f32 %v1025, %v1123
        %v1125 = vsub.f32 %v1030, %v1123
        %v1126 = vsub.f32 %v1035, %v1123
        %v1127 = vsub.f32 %v1040, %v1123
        %v1128 = vsub.f32 %v1045, %v1123
        %v1129 = vsub.f32 %v1050, %v1123
        %v1130 = vsub.f32 %v1055, %v1123
        %v1131 = vsub.f32 %v1060, %v1123
        %v1132 = vsub.f32 %v1065, %v1123
        %v1133 = vsub.f32 %v1070, %v1123
        %v1134 = vsub.f32 %v1075, %v1123
        %v1135 = vsub.f32 %v1080, %v1123
        %v1136 = vsub.f32 %v1085, %v1123
        %v1137 = vsub.f32 %v1090, %v1123
        %v1138 = vsub.f32 %v1095, %v1123
        %v1139 = vsub.f32 %v1100, %v1123
        %v1140 = vmul.f32 %v1124, 1.442695
        %v1141 = vpow.pop %v1140
        %v1142 = vmul.f32 %v1125, 1.442695
        %v1143 = vpow.pop %v1142
        %v1144 = vmul.f32 %v1126, 1.442695
        %v1145 = vpow.pop %v1144
        %v1146 = vmul.f32 %v1127, 1.442695
        %v1147 = vpow.pop %v1146
        %v1148 = vmul.f32 %v1128, 1.442695
        %v1149 = vpow.pop %v1148
        %v1150 = vmul.f32 %v1129, 1.442695
        %v1151 = vpow.pop %v1150
        %v1152 = vmul.f32 %v1130, 1.442695
        %v1153 = vpow.pop %v1152
        %v1154 = vmul.f32 %v1131, 1.442695
        %v1155 = vpow.pop %v1154
        %v1156 = vmul.f32 %v1132, 1.442695
        %v1157 = vpow.pop %v1156
        %v1158 = vmul.f32 %v1133, 1.442695
        %v1159 = vpow.pop %v1158
        %v1160 = vmul.f32 %v1134, 1.442695
        %v1161 = vpow.pop %v1160
        %v1162 = vmul.f32 %v1135, 1.442695
        %v1163 = vpow.pop %v1162
        %v1164 = vmul.f32 %v1136, 1.442695
        %v1165 = vpow.pop %v1164
        %v1166 = vmul.f32 %v1137, 1.442695
        %v1167 = vpow.pop %v1166
        %v1168 = vmul.f32 %v1138, 1.442695
        %v1169 = vpow.pop %v1168
        %v1170 = vmul.f32 %v1139, 1.442695
        %v1171 = vpow.pop %v1170
        %v1172 = vadd.f32 %v1141, %v1143
        %v1173 = vadd.f32 %v1172, %v1145
        %v1174 = vadd.f32 %v1173, %v1147
        %v1175 = vadd.f32 %v1174, %v1149
        %v1176 = vadd.f32 %v1175, %v1151
        %v1177 = vadd.f32 %v1176, %v1153
        %v1178 = vadd.f32 %v1177, %v1155
        %v1179 = vadd.f32 %v1178, %v1157
        %v1180 = vadd.f32 %v1179, %v1159
        %v1181 = vadd.f32 %v1180, %v1161
        %v1182 = vadd.f32 %v1181, %v1163
        %v1183 = vadd.f32 %v1182, %v1165
        %v1184 = vadd.f32 %v1183, %v1167
        %v1185 = vadd.f32 %v1184, %v1169
        %v1186 = vadd.f32 %v1185, %v1171
        %v1187 = vrot.slane %v1186, 4
        %v1188 = vadd.f32 %v1186, %v1187
        %v1189 = vrot.slane %v1188, 2
        %v1190 = vadd.f32 %v1188, %v1189
        %v1191 = vrot.slane %v1190, 1
        %v1192 = vadd.f32 %v1190, %v1191
        %1193 = vmatprep.subr.mxu0 0.0
        %1194 = vmatpush1.msra.mxu0 %v1171
        %1195 = vmatprep.subr.mxu0 0.0
        %1196 = vmatpush1.msra.mxu0 %v1169
        %1197 = vmatprep.subr.mxu0 0.0
        %1198 = vmatpush1.msra.mxu0 %v1167
        %1199 = vmatprep.subr.mxu0 0.0
        %1200 = vmatpush1.msra.mxu0 %v1165
        %1201 = vmatprep.subr.mxu0 0.0
        %1202 = vmatpush1.msra.mxu0 %v1163
        %1203 = vmatprep.subr.mxu0 0.0
        %1204 = vmatpush1.msra.mxu0 %v1161
        %1205 = vmatprep.subr.mxu0 0.0
        %1206 = vmatpush1.msra.mxu0 %v1159
        %1207 = vmatprep.subr.mxu0 0.0
        %1208 = vmatpush1.msra.mxu0 %v1157
        %1209 = vmatprep.subr.mxu0 0.0
        %1210 = vmatpush1.msra.mxu0 %v1155
        %1211 = vmatprep.subr.mxu0 0.0
        %1212 = vmatpush1.msra.mxu0 %v1153
        %1213 = vmatprep.subr.mxu0 0.0
        %1214 = vmatpush1.msra.mxu0 %v1151
        %1215 = vmatprep.subr.mxu0 0.0
        %1216 = vmatpush1.msra.mxu0 %v1149
        %1217 = vmatprep.subr.mxu0 0.0
        %1218 = vmatpush1.msra.mxu0 %v1147
        %1219 = vmatprep.subr.mxu0 0.0
        %1220 = vmatpush1.msra.mxu0 %v1145
        %1221 = vmatprep.subr.mxu0 0.0
        %1222 = vmatpush1.msra.mxu0 %v1143
        %1223 = vmatprep.subr.mxu0 0.0
        %1224 = vmatpush1.msra.mxu0 %v1141
        %1225 = vmatprep.subr.mxu0 0.0
        %1226 = vmatpush2.msra.mxu0 0.0
        %1227 = vmatprep.subr.mxu0 0.0
        %1228 = vmatpush2.msra.mxu0 0.0
        %1229 = vmatprep.subr.mxu0 0.0
        %1230 = vmatpush2.msra.mxu0 0.0
        %1231 = vmatprep.subr.mxu0 0.0
        %1232 = vmatpush2.msra.mxu0 0.0
        %1233 = vmatprep.subr.mxu0 0.0
        %1234 = vmatpush2.msra.mxu0 0.0
        %1235 = vmatprep.subr.mxu0 0.0
        %1236 = vmatpush2.msra.mxu0 0.0
        %1237 = vmatprep.subr.mxu0 0.0
        %1238 = vmatpush2.msra.mxu0 0.0
        %1239 = vmatprep.subr.mxu0 0.0
        %1240 = vmatpush2.msra.mxu0 0.0
        %1241 = vmatprep.subr.mxu0 0.0
        %1242 = vmatpush2.msra.mxu0 0.0
        %1243 = vmatprep.subr.mxu0 0.0
        %1244 = vmatpush2.msra.mxu0 0.0
        %1245 = vmatprep.subr.mxu0 0.0
        %1246 = vmatpush2.msra.mxu0 0.0
        %1247 = vmatprep.subr.mxu0 0.0
        %1248 = vmatpush2.msra.mxu0 0.0
        %1249 = vmatprep.subr.mxu0 0.0
        %1250 = vmatpush2.msra.mxu0 0.0
        %1251 = vmatprep.subr.mxu0 0.0
        %1252 = vmatpush2.msra.mxu0 0.0
        %1253 = vmatprep.subr.mxu0 0.0
        %1254 = vmatpush2.msra.mxu0 0.0
        %1255 = vmatprep.subr.mxu0 0.0
        %1256 = vmatpush2.msra.mxu0 0.0
        %1257 = vmatprep.mubr.f32.mxu0 0.0
        %1258 = vmatmul.mubr.f32.gmra.mxu0 %v869
        %v1259 = vpop.f32.mrf.mxu0
        %v1260 = vadd.f32 0.0, %v1259
        %v1261 = vpop.f32.mrf.mxu0
        %1262 = vmatprep.mubr.f32.mxu0 0.0
        %1263 = vmatmul.mubr.f32.gmra.mxu0 %v870
        %v1264 = vpop.f32.mrf.mxu0
        %v1265 = vadd.f32 0.0, %v1264
        %v1266 = vpop.f32.mrf.mxu0
        %1267 = vmatprep.mubr.f32.mxu0 0.0
        %1268 = vmatmul.mubr.f32.gmra.mxu0 %v871
        %v1269 = vpop.f32.mrf.mxu0
        %v1270 = vadd.f32 0.0, %v1269
        %v1271 = vpop.f32.mrf.mxu0
        %1272 = vmatprep.mubr.f32.mxu0 0.0
        %1273 = vmatmul.mubr.f32.gmra.mxu0 %v872
        %v1274 = vpop.f32.mrf.mxu0
        %v1275 = vadd.f32 0.0, %v1274
        %v1276 = vpop.f32.mrf.mxu0
        %1277 = vmatprep.mubr.f32.mxu0 0.0
        %1278 = vmatmul.mubr.f32.gmra.mxu0 %v873
        %v1279 = vpop.f32.mrf.mxu0
        %v1280 = vadd.f32 0.0, %v1279
        %v1281 = vpop.f32.mrf.mxu0
        %1282 = vmatprep.mubr.f32.mxu0 0.0
        %1283 = vmatmul.mubr.f32.gmra.mxu0 %v874
        %v1284 = vpop.f32.mrf.mxu0
        %v1285 = vadd.f32 0.0, %v1284
        %v1286 = vpop.f32.mrf.mxu0
        %1287 = vmatprep.mubr.f32.mxu0 0.0
        %1288 = vmatmul.mubr.f32.gmra.mxu0 %v875
        %v1289 = vpop.f32.mrf.mxu0
        %v1290 = vadd.f32 0.0, %v1289
        %v1291 = vpop.f32.mrf.mxu0
        %1292 = vmatprep.mubr.f32.mxu0 0.0
        %1293 = vmatmul.mubr.f32.gmra.mxu0 %v876
        %v1294 = vpop.f32.mrf.mxu0
        %v1295 = vadd.f32 0.0, %v1294
        %v1296 = vpop.f32.mrf.mxu0
        %1297 = vdwg.mxu0
        %s1298 = scalar_lea.vmem [#allocation3], 8
        %v1299 = vld [vmem:[%s1298] sm:$0xff]
        %s1300 = scalar_lea.vmem [#allocation4], 8
        %v1301 = vld [vmem:[%s1300] sm:$0xff]
        %v1302 = vld [vmem:[%s1300 + $0x10] sm:$0xff]
        %v1303 = vld [vmem:[%s1300 + $0x20] sm:$0xff]
        %v1304 = vld [vmem:[%s1300 + $0x30] sm:$0xff]
        %v1305 = vld [vmem:[%s1300 + $0x40] sm:$0xff]
        %v1306 = vld [vmem:[%s1300 + $0x50] sm:$0xff]
        %v1307 = vld [vmem:[%s1300 + $0x60] sm:$0xff]
        %v1308 = vld [vmem:[%s1300 + $0x70] sm:$0xff]
        %1309 = vxpose.xlu0.b32.start [1/16] %v1299, 128
        %1310 = vxpose.xlu0.b32.cont [2/16] 0.0, 128
        %1311 = vxpose.xlu0.b32.cont [3/16] 0.0, 128
        %1312 = vxpose.xlu0.b32.cont [4/16] 0.0, 128
        %1313 = vxpose.xlu0.b32.cont [5/16] 0.0, 128
        %1314 = vxpose.xlu0.b32.cont [6/16] 0.0, 128
        %1315 = vxpose.xlu0.b32.cont [7/16] 0.0, 128
        %1316 = vxpose.xlu0.b32.cont [8/16] 0.0, 128
        %1317 = vxpose.xlu0.b32.cont [9/16] 0.0, 128
        %1318 = vxpose.xlu0.b32.cont [10/16] 0.0, 128
        %1319 = vxpose.xlu0.b32.cont [11/16] 0.0, 128
        %1320 = vxpose.xlu0.b32.cont [12/16] 0.0, 128
        %1321 = vxpose.xlu0.b32.cont [13/16] 0.0, 128
        %1322 = vxpose.xlu0.b32.cont [14/16] 0.0, 128
        %1323 = vxpose.xlu0.b32.cont [15/16] 0.0, 128
        %1324 = vxpose.xlu0.b32.end [16/16] 0.0, 128
        %v1325 = vpop.trf.xlu0
        %v1326 = vpop.trf.xlu0
        %v1327 = vpop.trf.xlu0
        %v1328 = vpop.trf.xlu0
        %v1329 = vpop.trf.xlu0
        %v1330 = vpop.trf.xlu0
        %v1331 = vpop.trf.xlu0
        %v1332 = vpop.trf.xlu0
        %v1333 = vpop.trf.xlu0
        %v1334 = vpop.trf.xlu0
        %v1335 = vpop.trf.xlu0
        %v1336 = vpop.trf.xlu0
        %v1337 = vpop.trf.xlu0
        %v1338 = vpop.trf.xlu0
        %v1339 = vpop.trf.xlu0
        %v1340 = vpop.trf.xlu0
        %v1342 = vsel %vm909, %v1325, 0
        %v1345 = vsel %vm909, %v1326, 0
        %v1348 = vsel %vm909, %v1327, 0
        %v1351 = vsel %vm909, %v1328, 0
        %v1354 = vsel %vm909, %v1329, 0
        %v1357 = vsel %vm909, %v1330, 0
        %v1360 = vsel %vm909, %v1331, 0
        %v1363 = vsel %vm909, %v1332, 0
        %v1366 = vsel %vm909, %v1333, 0
        %v1369 = vsel %vm909, %v1334, 0
        %v1372 = vsel %vm909, %v1335, 0
        %v1375 = vsel %vm909, %v1336, 0
        %v1378 = vsel %vm909, %v1337, 0
        %v1381 = vsel %vm909, %v1338, 0
        %v1384 = vsel %vm909, %v1339, 0
        %v1387 = vsel %vm909, %v1340, 0
        %1389 = vmatprep.subr.mxu0 0.0
        %1390 = vmatpush1.msra.mxu0 0.0
        %1391 = vmatprep.subr.mxu0 0.0
        %1392 = vmatpush1.msra.mxu0 0.0
        %1393 = vmatprep.subr.mxu0 0.0
        %1394 = vmatpush1.msra.mxu0 0.0
        %1395 = vmatprep.subr.mxu0 0.0
        %1396 = vmatpush1.msra.mxu0 0.0
        %1397 = vmatprep.subr.mxu0 0.0
        %1398 = vmatpush1.msra.mxu0 0.0
        %1399 = vmatprep.subr.mxu0 0.0
        %1400 = vmatpush1.msra.mxu0 0.0
        %1401 = vmatprep.subr.mxu0 0.0
        %1402 = vmatpush1.msra.mxu0 0.0
        %1403 = vmatprep.subr.mxu0 0.0
        %1404 = vmatpush1.msra.mxu0 0.0
        %1405 = vmatprep.subr.mxu0 0.0
        %1406 = vmatpush1.msra.mxu0 0.0
        %1407 = vmatprep.subr.mxu0 0.0
        %1408 = vmatpush1.msra.mxu0 0.0
        %1409 = vmatprep.subr.mxu0 0.0
        %1410 = vmatpush1.msra.mxu0 0.0
        %1411 = vmatprep.subr.mxu0 0.0
        %1412 = vmatpush1.msra.mxu0 0.0
        %1413 = vmatprep.subr.mxu0 0.0
        %1414 = vmatpush1.msra.mxu0 0.0
        %1415 = vmatprep.subr.mxu0 0.0
        %1416 = vmatpush1.msra.mxu0 0.0
        %1417 = vmatprep.subr.mxu0 0.0
        %1418 = vmatpush1.msra.mxu0 0.0
        %1419 = vmatprep.subr.mxu0 0.0
        %1420 = vmatpush1.msra.mxu0 %v865
        %1421 = vmatprep.subr.mxu0 0.0
        %1422 = vmatpush2.msra.mxu0 0.0
        %1423 = vmatprep.subr.mxu0 0.0
        %1424 = vmatpush2.msra.mxu0 0.0
        %1425 = vmatprep.subr.mxu0 0.0
        %1426 = vmatpush2.msra.mxu0 0.0
        %1427 = vmatprep.subr.mxu0 0.0
        %1428 = vmatpush2.msra.mxu0 0.0
        %1429 = vmatprep.subr.mxu0 0.0
        %1430 = vmatpush2.msra.mxu0 0.0
        %1431 = vmatprep.subr.mxu0 0.0
        %1432 = vmatpush2.msra.mxu0 0.0
        %1433 = vmatprep.subr.mxu0 0.0
        %1434 = vmatpush2.msra.mxu0 0.0
        %1435 = vmatprep.subr.mxu0 0.0
        %1436 = vmatpush2.msra.mxu0 0.0
        %1437 = vmatprep.subr.mxu0 0.0
        %1438 = vmatpush2.msra.mxu0 0.0
        %1439 = vmatprep.subr.mxu0 0.0
        %1440 = vmatpush2.msra.mxu0 0.0
        %1441 = vmatprep.subr.mxu0 0.0
        %1442 = vmatpush2.msra.mxu0 0.0
        %1443 = vmatprep.subr.mxu0 0.0
        %1444 = vmatpush2.msra.mxu0 0.0
        %1445 = vmatprep.subr.mxu0 0.0
        %1446 = vmatpush2.msra.mxu0 0.0
        %1447 = vmatprep.subr.mxu0 0.0
        %1448 = vmatpush2.msra.mxu0 0.0
        %1449 = vmatprep.subr.mxu0 0.0
        %1450 = vmatpush2.msra.mxu0 0.0
        %1451 = vmatprep.subr.mxu0 0.0
        %1452 = vmatpush2.msra.mxu0 0.0
        %1453 = vmatprep.mubr.f32.mxu0 0.0
        %1454 = vmatmul.mubr.f32.gmra.mxu0 %v1342
        %v1455 = vpop.f32.mrf.mxu0
        %v1456 = vadd.f32 0.0, %v1455
        %v1457 = vpop.f32.mrf.mxu0
        %1458 = vmatprep.mubr.f32.mxu0 0.0
        %1459 = vmatmul.mubr.f32.gmra.mxu0 %v1345
        %v1460 = vpop.f32.mrf.mxu0
        %v1461 = vadd.f32 0.0, %v1460
        %v1462 = vpop.f32.mrf.mxu0
        %1463 = vmatprep.mubr.f32.mxu0 0.0
        %1464 = vmatmul.mubr.f32.gmra.mxu0 %v1348
        %v1465 = vpop.f32.mrf.mxu0
        %v1466 = vadd.f32 0.0, %v1465
        %v1467 = vpop.f32.mrf.mxu0
        %1468 = vmatprep.mubr.f32.mxu0 0.0
        %1469 = vmatmul.mubr.f32.gmra.mxu0 %v1351
        %v1470 = vpop.f32.mrf.mxu0
        %v1471 = vadd.f32 0.0, %v1470
        %v1472 = vpop.f32.mrf.mxu0
        %1473 = vmatprep.mubr.f32.mxu0 0.0
        %1474 = vmatmul.mubr.f32.gmra.mxu0 %v1354
        %v1475 = vpop.f32.mrf.mxu0
        %v1476 = vadd.f32 0.0, %v1475
        %v1477 = vpop.f32.mrf.mxu0
        %1478 = vmatprep.mubr.f32.mxu0 0.0
        %1479 = vmatmul.mubr.f32.gmra.mxu0 %v1357
        %v1480 = vpop.f32.mrf.mxu0
        %v1481 = vadd.f32 0.0, %v1480
        %v1482 = vpop.f32.mrf.mxu0
        %1483 = vmatprep.mubr.f32.mxu0 0.0
        %1484 = vmatmul.mubr.f32.gmra.mxu0 %v1360
        %v1485 = vpop.f32.mrf.mxu0
        %v1486 = vadd.f32 0.0, %v1485
        %v1487 = vpop.f32.mrf.mxu0
        %1488 = vmatprep.mubr.f32.mxu0 0.0
        %1489 = vmatmul.mubr.f32.gmra.mxu0 %v1363
        %v1490 = vpop.f32.mrf.mxu0
        %v1491 = vadd.f32 0.0, %v1490
        %v1492 = vpop.f32.mrf.mxu0
        %1493 = vmatprep.mubr.f32.mxu0 0.0
        %1494 = vmatmul.mubr.f32.gmra.mxu0 %v1366
        %v1495 = vpop.f32.mrf.mxu0
        %v1496 = vadd.f32 0.0, %v1495
        %v1497 = vpop.f32.mrf.mxu0
        %1498 = vmatprep.mubr.f32.mxu0 0.0
        %1499 = vmatmul.mubr.f32.gmra.mxu0 %v1369
        %v1500 = vpop.f32.mrf.mxu0
        %v1501 = vadd.f32 0.0, %v1500
        %v1502 = vpop.f32.mrf.mxu0
        %1503 = vmatprep.mubr.f32.mxu0 0.0
        %1504 = vmatmul.mubr.f32.gmra.mxu0 %v1372
        %v1505 = vpop.f32.mrf.mxu0
        %v1506 = vadd.f32 0.0, %v1505
        %v1507 = vpop.f32.mrf.mxu0
        %1508 = vmatprep.mubr.f32.mxu0 0.0
        %1509 = vmatmul.mubr.f32.gmra.mxu0 %v1375
        %v1510 = vpop.f32.mrf.mxu0
        %v1511 = vadd.f32 0.0, %v1510
        %v1512 = vpop.f32.mrf.mxu0
        %1513 = vmatprep.mubr.f32.mxu0 0.0
        %1514 = vmatmul.mubr.f32.gmra.mxu0 %v1378
        %v1515 = vpop.f32.mrf.mxu0
        %v1516 = vadd.f32 0.0, %v1515
        %v1517 = vpop.f32.mrf.mxu0
        %1518 = vmatprep.mubr.f32.mxu0 0.0
        %1519 = vmatmul.mubr.f32.gmra.mxu0 %v1381
        %v1520 = vpop.f32.mrf.mxu0
        %v1521 = vadd.f32 0.0, %v1520
        %v1522 = vpop.f32.mrf.mxu0
        %1523 = vmatprep.mubr.f32.mxu0 0.0
        %1524 = vmatmul.mubr.f32.gmra.mxu0 %v1384
        %v1525 = vpop.f32.mrf.mxu0
        %v1526 = vadd.f32 0.0, %v1525
        %v1527 = vpop.f32.mrf.mxu0
        %1528 = vmatprep.mubr.f32.mxu0 0.0
        %1529 = vmatmul.mubr.f32.gmra.mxu0 %v1387
        %v1530 = vpop.f32.mrf.mxu0
        %v1531 = vadd.f32 0.0, %v1530
        %v1532 = vpop.f32.mrf.mxu0
        %1533 = vdwg.mxu0
        %v1534 = vmax.f32 %v1456, %v1476
        %v1535 = vmax.f32 %v1461, %v1481
        %v1536 = vmax.f32 %v1466, %v1486
        %v1537 = vmax.f32 %v1471, %v1491
        %v1538 = vmax.f32 %v1534, %v1496
        %v1539 = vmax.f32 %v1535, %v1501
        %v1540 = vmax.f32 %v1536, %v1506
        %v1541 = vmax.f32 %v1537, %v1511
        %v1542 = vmax.f32 %v1538, %v1516
        %v1543 = vmax.f32 %v1539, %v1521
        %v1544 = vmax.f32 %v1540, %v1526
        %v1545 = vmax.f32 %v1541, %v1531
        %v1546 = vmax.f32 %v1542, %v1543
        %v1547 = vmax.f32 %v1544, %v1545
        %v1548 = vmax.f32 %v1546, %v1547
        %v1549 = vrot.slane %v1548, 4
        %v1550 = vmax.f32 %v1548, %v1549
        %v1551 = vrot.slane %v1550, 2
        %v1552 = vmax.f32 %v1550, %v1551
        %v1553 = vrot.slane %v1552, 1
        %v1554 = vmax.f32 %v1552, %v1553
        %v1555 = vmax.f32 %v1123, %v1554
        %v1556 = vsub.f32 %v1123, %v1555
        %v1557 = vmul.f32 %v1556, 1.442695
        %v1558 = vpow.pop %v1557
        %v1559 = vsub.f32 %v1456, %v1555
        %v1560 = vsub.f32 %v1461, %v1555
        %v1561 = vsub.f32 %v1466, %v1555
        %v1562 = vsub.f32 %v1471, %v1555
        %v1563 = vsub.f32 %v1476, %v1555
        %v1564 = vsub.f32 %v1481, %v1555
        %v1565 = vsub.f32 %v1486, %v1555
        %v1566 = vsub.f32 %v1491, %v1555
        %v1567 = vsub.f32 %v1496, %v1555
        %v1568 = vsub.f32 %v1501, %v1555
        %v1569 = vsub.f32 %v1506, %v1555
        %v1570 = vsub.f32 %v1511, %v1555
        %v1571 = vsub.f32 %v1516, %v1555
        %v1572 = vsub.f32 %v1521, %v1555
        %v1573 = vsub.f32 %v1526, %v1555
        %v1574 = vsub.f32 %v1531, %v1555
        %v1575 = vmul.f32 %v1559, 1.442695
        %v1576 = vpow.pop %v1575
        %v1577 = vmul.f32 %v1560, 1.442695
        %v1578 = vpow.pop %v1577
        %v1579 = vmul.f32 %v1561, 1.442695
        %v1580 = vpow.pop %v1579
        %v1581 = vmul.f32 %v1562, 1.442695
        %v1582 = vpow.pop %v1581
        %v1583 = vmul.f32 %v1563, 1.442695
        %v1584 = vpow.pop %v1583
        %v1585 = vmul.f32 %v1564, 1.442695
        %v1586 = vpow.pop %v1585
        %v1587 = vmul.f32 %v1565, 1.442695
        %v1588 = vpow.pop %v1587
        %v1589 = vmul.f32 %v1566, 1.442695
        %v1590 = vpow.pop %v1589
        %v1591 = vmul.f32 %v1567, 1.442695
        %v1592 = vpow.pop %v1591
        %v1593 = vmul.f32 %v1568, 1.442695
        %v1594 = vpow.pop %v1593
        %v1595 = vmul.f32 %v1569, 1.442695
        %v1596 = vpow.pop %v1595
        %v1597 = vmul.f32 %v1570, 1.442695
        %v1598 = vpow.pop %v1597
        %v1599 = vmul.f32 %v1571, 1.442695
        %v1600 = vpow.pop %v1599
        %v1601 = vmul.f32 %v1572, 1.442695
        %v1602 = vpow.pop %v1601
        %v1603 = vmul.f32 %v1573, 1.442695
        %v1604 = vpow.pop %v1603
        %v1605 = vmul.f32 %v1574, 1.442695
        %v1606 = vpow.pop %v1605
        %v1607 = vmul.f32 %v1558, %v1192
        %v1608 = vadd.f32 %v1576, %v1578
        %v1609 = vadd.f32 %v1608, %v1580
        %v1610 = vadd.f32 %v1609, %v1582
        %v1611 = vadd.f32 %v1610, %v1584
        %v1612 = vadd.f32 %v1611, %v1586
        %v1613 = vadd.f32 %v1612, %v1588
        %v1614 = vadd.f32 %v1613, %v1590
        %v1615 = vadd.f32 %v1614, %v1592
        %v1616 = vadd.f32 %v1615, %v1594
        %v1617 = vadd.f32 %v1616, %v1596
        %v1618 = vadd.f32 %v1617, %v1598
        %v1619 = vadd.f32 %v1618, %v1600
        %v1620 = vadd.f32 %v1619, %v1602
        %v1621 = vadd.f32 %v1620, %v1604
        %v1622 = vadd.f32 %v1621, %v1606
        %v1623 = vrot.slane %v1622, 4
        %v1624 = vadd.f32 %v1622, %v1623
        %v1625 = vrot.slane %v1624, 2
        %v1626 = vadd.f32 %v1624, %v1625
        %v1627 = vrot.slane %v1626, 1
        %v1628 = vadd.f32 %v1626, %v1627
        %v1629 = vadd.f32 %v1607, %v1628
        %v1630 = vmul.f32 %v1558, %v1260
        %v1631 = vmul.f32 %v1558, %v1265
        %v1632 = vmul.f32 %v1558, %v1270
        %v1633 = vmul.f32 %v1558, %v1275
        %v1634 = vmul.f32 %v1558, %v1280
        %v1635 = vmul.f32 %v1558, %v1285
        %v1636 = vmul.f32 %v1558, %v1290
        %v1637 = vmul.f32 %v1558, %v1295
        %1638 = vmatprep.subr.mxu0 0.0
        %1639 = vmatpush1.msra.mxu0 %v1606
        %1640 = vmatprep.subr.mxu0 0.0
        %1641 = vmatpush1.msra.mxu0 %v1604
        %1642 = vmatprep.subr.mxu0 0.0
        %1643 = vmatpush1.msra.mxu0 %v1602
        %1644 = vmatprep.subr.mxu0 0.0
        %1645 = vmatpush1.msra.mxu0 %v1600
        %1646 = vmatprep.subr.mxu0 0.0
        %1647 = vmatpush1.msra.mxu0 %v1598
        %1648 = vmatprep.subr.mxu0 0.0
        %1649 = vmatpush1.msra.mxu0 %v1596
        %1650 = vmatprep.subr.mxu0 0.0
        %1651 = vmatpush1.msra.mxu0 %v1594
        %1652 = vmatprep.subr.mxu0 0.0
        %1653 = vmatpush1.msra.mxu0 %v1592
        %1654 = vmatprep.subr.mxu0 0.0
        %1655 = vmatpush1.msra.mxu0 %v1590
        %1656 = vmatprep.subr.mxu0 0.0
        %1657 = vmatpush1.msra.mxu0 %v1588
        %1658 = vmatprep.subr.mxu0 0.0
        %1659 = vmatpush1.msra.mxu0 %v1586
        %1660 = vmatprep.subr.mxu0 0.0
        %1661 = vmatpush1.msra.mxu0 %v1584
        %1662 = vmatprep.subr.mxu0 0.0
        %1663 = vmatpush1.msra.mxu0 %v1582
        %1664 = vmatprep.subr.mxu0 0.0
        %1665 = vmatpush1.msra.mxu0 %v1580
        %1666 = vmatprep.subr.mxu0 0.0
        %1667 = vmatpush1.msra.mxu0 %v1578
        %1668 = vmatprep.subr.mxu0 0.0
        %1669 = vmatpush1.msra.mxu0 %v1576
        %1670 = vmatprep.subr.mxu0 0.0
        %1671 = vmatpush2.msra.mxu0 0.0
        %1672 = vmatprep.subr.mxu0 0.0
        %1673 = vmatpush2.msra.mxu0 0.0
        %1674 = vmatprep.subr.mxu0 0.0
        %1675 = vmatpush2.msra.mxu0 0.0
        %1676 = vmatprep.subr.mxu0 0.0
        %1677 = vmatpush2.msra.mxu0 0.0
        %1678 = vmatprep.subr.mxu0 0.0
        %1679 = vmatpush2.msra.mxu0 0.0
        %1680 = vmatprep.subr.mxu0 0.0
        %1681 = vmatpush2.msra.mxu0 0.0
        %1682 = vmatprep.subr.mxu0 0.0
        %1683 = vmatpush2.msra.mxu0 0.0
        %1684 = vmatprep.subr.mxu0 0.0
        %1685 = vmatpush2.msra.mxu0 0.0
        %1686 = vmatprep.subr.mxu0 0.0
        %1687 = vmatpush2.msra.mxu0 0.0
        %1688 = vmatprep.subr.mxu0 0.0
        %1689 = vmatpush2.msra.mxu0 0.0
        %1690 = vmatprep.subr.mxu0 0.0
        %1691 = vmatpush2.msra.mxu0 0.0
        %1692 = vmatprep.subr.mxu0 0.0
        %1693 = vmatpush2.msra.mxu0 0.0
        %1694 = vmatprep.subr.mxu0 0.0
        %1695 = vmatpush2.msra.mxu0 0.0
        %1696 = vmatprep.subr.mxu0 0.0
        %1697 = vmatpush2.msra.mxu0 0.0
        %1698 = vmatprep.subr.mxu0 0.0
        %1699 = vmatpush2.msra.mxu0 0.0
        %1700 = vmatprep.subr.mxu0 0.0
        %1701 = vmatpush2.msra.mxu0 0.0
        %1702 = vmatprep.mubr.f32.mxu0 0.0
        %1703 = vmatmul.mubr.f32.gmra.mxu0 %v1301
        %v1704 = vpop.f32.mrf.mxu0
        %v1705 = vadd.f32 0.0, %v1704
        %v1706 = vpop.f32.mrf.mxu0
        %1707 = vmatprep.mubr.f32.mxu0 0.0
        %1708 = vmatmul.mubr.f32.gmra.mxu0 %v1302
        %v1709 = vpop.f32.mrf.mxu0
        %v1710 = vadd.f32 0.0, %v1709
        %v1711 = vpop.f32.mrf.mxu0
        %1712 = vmatprep.mubr.f32.mxu0 0.0
        %1713 = vmatmul.mubr.f32.gmra.mxu0 %v1303
        %v1714 = vpop.f32.mrf.mxu0
        %v1715 = vadd.f32 0.0, %v1714
        %v1716 = vpop.f32.mrf.mxu0
        %1717 = vmatprep.mubr.f32.mxu0 0.0
        %1718 = vmatmul.mubr.f32.gmra.mxu0 %v1304
        %v1719 = vpop.f32.mrf.mxu0
        %v1720 = vadd.f32 0.0, %v1719
        %v1721 = vpop.f32.mrf.mxu0
        %1722 = vmatprep.mubr.f32.mxu0 0.0
        %1723 = vmatmul.mubr.f32.gmra.mxu0 %v1305
        %v1724 = vpop.f32.mrf.mxu0
        %v1725 = vadd.f32 0.0, %v1724
        %v1726 = vpop.f32.mrf.mxu0
        %1727 = vmatprep.mubr.f32.mxu0 0.0
        %1728 = vmatmul.mubr.f32.gmra.mxu0 %v1306
        %v1729 = vpop.f32.mrf.mxu0
        %v1730 = vadd.f32 0.0, %v1729
        %v1731 = vpop.f32.mrf.mxu0
        %1732 = vmatprep.mubr.f32.mxu0 0.0
        %1733 = vmatmul.mubr.f32.gmra.mxu0 %v1307
        %v1734 = vpop.f32.mrf.mxu0
        %v1735 = vadd.f32 0.0, %v1734
        %v1736 = vpop.f32.mrf.mxu0
        %1737 = vmatprep.mubr.f32.mxu0 0.0
        %1738 = vmatmul.mubr.f32.gmra.mxu0 %v1308
        %v1739 = vpop.f32.mrf.mxu0
        %v1740 = vadd.f32 0.0, %v1739
        %v1741 = vpop.f32.mrf.mxu0
        %1742 = vdwg.mxu0
        %v1743 = vadd.f32 %v1630, %v1705
        %v1744 = vadd.f32 %v1631, %v1710
        %v1745 = vadd.f32 %v1632, %v1715
        %v1746 = vadd.f32 %v1633, %v1720
        %v1747 = vadd.f32 %v1634, %v1725
        %v1748 = vadd.f32 %v1635, %v1730
        %v1749 = vadd.f32 %v1636, %v1735
        %v1750 = vadd.f32 %v1637, %v1740
        %v1751 = vld [vmem:[#allocation2] sm:$0xff]
        %v1752 = vld [vmem:[#allocation2 + $0x8] sm:$0xff]
        %v1753 = vld [vmem:[#allocation2 + $0x10] sm:$0xff]
        %v1754 = vld [vmem:[#allocation2 + $0x18] sm:$0xff]
        %v1755 = vld [vmem:[#allocation2 + $0x20] sm:$0xff]
        %v1756 = vld [vmem:[#allocation2 + $0x28] sm:$0xff]
        %v1757 = vld [vmem:[#allocation2 + $0x30] sm:$0xff]
        %v1758 = vld [vmem:[#allocation2 + $0x38] sm:$0xff]
        %v1759 = vrcp.pop %v1629
        %v1760 = vstv %s310
        %v1761 = vmul.f32 %v1760, %v1759
        %v1762 = vmul.f32 %v1743, %v1761
        %v1763 = vmul.f32 %v1744, %v1761
        %v1764 = vmul.f32 %v1745, %v1761
        %v1765 = vmul.f32 %v1746, %v1761
        %v1766 = vmul.f32 %v1747, %v1761
        %v1767 = vmul.f32 %v1748, %v1761
        %v1768 = vmul.f32 %v1749, %v1761
        %v1769 = vmul.f32 %v1750, %v1761
        %v1771 = vsel %vm794, %v1751, 0
        %v1774 = vsel %vm794, %v1752, 0
        %v1777 = vsel %vm794, %v1753, 0
        %v1780 = vsel %vm794, %v1754, 0
        %v1783 = vsel %vm794, %v1755, 0
        %v1786 = vsel %vm794, %v1756, 0
        %v1789 = vsel %vm794, %v1757, 0
        %v1792 = vsel %vm794, %v1758, 0
        %1794 = vmatprep.subr.mxu0 0.0
        %1795 = vmatpush1.msra.mxu0 0.0
        %1796 = vmatprep.subr.mxu0 0.0
        %1797 = vmatpush1.msra.mxu0 0.0
        %1798 = vmatprep.subr.mxu0 0.0
        %1799 = vmatpush1.msra.mxu0 0.0
        %1800 = vmatprep.subr.mxu0 0.0
        %1801 = vmatpush1.msra.mxu0 0.0
        %1802 = vmatprep.subr.mxu0 0.0
        %1803 = vmatpush1.msra.mxu0 0.0
        %1804 = vmatprep.subr.mxu0 0.0
        %1805 = vmatpush1.msra.mxu0 0.0
        %1806 = vmatprep.subr.mxu0 0.0
        %1807 = vmatpush1.msra.mxu0 0.0
        %1808 = vmatprep.subr.mxu0 0.0
        %1809 = vmatpush1.msra.mxu0 0.0
        %1810 = vmatprep.subr.mxu0 0.0
        %1811 = vmatpush1.msra.mxu0 %v792
        %1812 = vmatprep.subr.mxu0 0.0
        %1813 = vmatpush1.msra.mxu0 %v791
        %1814 = vmatprep.subr.mxu0 0.0
        %1815 = vmatpush1.msra.mxu0 %v790
        %1816 = vmatprep.subr.mxu0 0.0
        %1817 = vmatpush1.msra.mxu0 %v789
        %1818 = vmatprep.subr.mxu0 0.0
        %1819 = vmatpush1.msra.mxu0 %v788
        %1820 = vmatprep.subr.mxu0 0.0
        %1821 = vmatpush1.msra.mxu0 %v787
        %1822 = vmatprep.subr.mxu0 0.0
        %1823 = vmatpush1.msra.mxu0 %v786
        %1824 = vmatprep.subr.mxu0 0.0
        %1825 = vmatpush1.msra.mxu0 %v785
        %1826 = vmatprep.subr.mxu0 0.0
        %1827 = vmatpush2.msra.mxu0 0.0
        %1828 = vmatprep.subr.mxu0 0.0
        %1829 = vmatpush2.msra.mxu0 0.0
        %1830 = vmatprep.subr.mxu0 0.0
        %1831 = vmatpush2.msra.mxu0 0.0
        %1832 = vmatprep.subr.mxu0 0.0
        %1833 = vmatpush2.msra.mxu0 0.0
        %1834 = vmatprep.subr.mxu0 0.0
        %1835 = vmatpush2.msra.mxu0 0.0
        %1836 = vmatprep.subr.mxu0 0.0
        %1837 = vmatpush2.msra.mxu0 0.0
        %1838 = vmatprep.subr.mxu0 0.0
        %1839 = vmatpush2.msra.mxu0 0.0
        %1840 = vmatprep.subr.mxu0 0.0
        %1841 = vmatpush2.msra.mxu0 0.0
        %1842 = vmatprep.subr.mxu0 0.0
        %1843 = vmatpush2.msra.mxu0 0.0
        %1844 = vmatprep.subr.mxu0 0.0
        %1845 = vmatpush2.msra.mxu0 0.0
        %1846 = vmatprep.subr.mxu0 0.0
        %1847 = vmatpush2.msra.mxu0 0.0
        %1848 = vmatprep.subr.mxu0 0.0
        %1849 = vmatpush2.msra.mxu0 0.0
        %1850 = vmatprep.subr.mxu0 0.0
        %1851 = vmatpush2.msra.mxu0 0.0
        %1852 = vmatprep.subr.mxu0 0.0
        %1853 = vmatpush2.msra.mxu0 0.0
        %1854 = vmatprep.subr.mxu0 0.0
        %1855 = vmatpush2.msra.mxu0 0.0
        %1856 = vmatprep.subr.mxu0 0.0
        %1857 = vmatpush2.msra.mxu0 0.0
        %1858 = vmatprep.mubr.f32.mxu0 0.0
        %1859 = vmatmul.mubr.f32.gmra.mxu0 %v1771
        %v1860 = vpop.f32.mrf.mxu0
        %v1861 = vadd.f32 %v1762, %v1860
        %v1862 = vpop.f32.mrf.mxu0
        %1863 = vmatprep.mubr.f32.mxu0 0.0
        %1864 = vmatmul.mubr.f32.gmra.mxu0 %v1774
        %v1865 = vpop.f32.mrf.mxu0
        %v1866 = vadd.f32 %v1763, %v1865
        %v1867 = vpop.f32.mrf.mxu0
        %1868 = vmatprep.mubr.f32.mxu0 0.0
        %1869 = vmatmul.mubr.f32.gmra.mxu0 %v1777
        %v1870 = vpop.f32.mrf.mxu0
        %v1871 = vadd.f32 %v1764, %v1870
        %v1872 = vpop.f32.mrf.mxu0
        %1873 = vmatprep.mubr.f32.mxu0 0.0
        %1874 = vmatmul.mubr.f32.gmra.mxu0 %v1780
        %v1875 = vpop.f32.mrf.mxu0
        %v1876 = vadd.f32 %v1765, %v1875
        %v1877 = vpop.f32.mrf.mxu0
        %1878 = vmatprep.mubr.f32.mxu0 0.0
        %1879 = vmatmul.mubr.f32.gmra.mxu0 %v1783
        %v1880 = vpop.f32.mrf.mxu0
        %v1881 = vadd.f32 %v1766, %v1880
        %v1882 = vpop.f32.mrf.mxu0
        %1883 = vmatprep.mubr.f32.mxu0 0.0
        %1884 = vmatmul.mubr.f32.gmra.mxu0 %v1786
        %v1885 = vpop.f32.mrf.mxu0
        %v1886 = vadd.f32 %v1767, %v1885
        %v1887 = vpop.f32.mrf.mxu0
        %1888 = vmatprep.mubr.f32.mxu0 0.0
        %1889 = vmatmul.mubr.f32.gmra.mxu0 %v1789
        %v1890 = vpop.f32.mrf.mxu0
        %v1891 = vadd.f32 %v1768, %v1890
        %v1892 = vpop.f32.mrf.mxu0
        %1893 = vmatprep.mubr.f32.mxu0 0.0
        %1894 = vmatmul.mubr.f32.gmra.mxu0 %v1792
        %v1895 = vpop.f32.mrf.mxu0
        %v1896 = vadd.f32 %v1769, %v1895
        %v1897 = vpop.f32.mrf.mxu0
        %1898 = vdwg.mxu0
        %v1899 = vmul.f32 %v785, 2.0
        %v1900 = vmul.f32 %v786, 2.0
        %v1901 = vmul.f32 %v787, 2.0
        %v1902 = vmul.f32 %v788, 2.0
        %v1903 = vmul.f32 %v789, 2.0
        %v1904 = vmul.f32 %v790, 2.0
        %v1905 = vmul.f32 %v791, 2.0
        %v1906 = vmul.f32 %v792, 2.0
        %v1907 = vadd.f32 %v1861, %v1899
        %v1908 = vadd.f32 %v1866, %v1900
        %v1909 = vadd.f32 %v1871, %v1901
        %v1910 = vadd.f32 %v1876, %v1902
        %v1911 = vadd.f32 %v1881, %v1903
        %v1912 = vadd.f32 %v1886, %v1904
        %v1913 = vadd.f32 %v1891, %v1905
        %v1914 = vadd.f32 %v1896, %v1906
        %1915 = vst [vmem:[%s308] sm:$0xff] %v1907
        %1916 = vst [vmem:[%s308 + $0x8] sm:$0xff] %v1908
        %1917 = vst [vmem:[%s308 + $0x10] sm:$0xff] %v1909
        %1918 = vst [vmem:[%s308 + $0x18] sm:$0xff] %v1910
        %1919 = vst [vmem:[%s308 + $0x20] sm:$0xff] %v1911
        %1920 = vst [vmem:[%s308 + $0x28] sm:$0xff] %v1912
        %1921 = vst [vmem:[%s308 + $0x30] sm:$0xff] %v1913
        %1922 = vst [vmem:[%s308 + $0x38] sm:$0xff] %v1914
        %s1923 = sand.u32 %s157, 1
        %s1924 = scalar_lea.sflag [#allocation7], %s1923
        %s1925 = sand.u32 %s157, 1
        %s1926 = smul.addr %s1925, 64
        %s1927 = scalar_lea.vmem [#allocation15], %s1926
        // Predicated region
        $region65: #{tpu_custom_call.1} parent=39 // pred_check
          %p1928 = pneg %p167
        $region66: #{tpu_custom_call.1} parent=39 // pred_check_branch
          %1930 = sbr.rel (%p1928) target = $region68
        $region67: #{tpu_custom_call.1} parent=39 // pred_region
          %s1932 = ssub.s32 1024, 1024
          %1933 = vsyncadd %s1924, %s1932
          %s1934 = smul.addr %s29, 16
          %s1935 = sadd.s32 %s30, %s1934
          %s1936 = smul.addr %s1935, 128
          %s1937 = scalar_lea.hbm %s5, %s1936
          %s1938 = sshll.u32 %s1927, 4
          %s1939 = int_to_ptr.vmem [resolvable:$true] %s1938
          %1944 = dma.vmem_to_hbm [thread:$0]  %s1939, 1024, %s1937, %s1924, 128, 256, 8
        $region68: #{tpu_custom_call.1} parent=39 // pred_fallthru
          _
      $region40: #{tpu_custom_call.1} parent=5 // pred_fallthru
        _
      %p1945 = scmp.le.s32.totalorder 2, %s20
      // Predicated region
      $region69: #{tpu_custom_call.1} parent=5 // pred_check
        %p1946 = pneg %p1945
      $region70: #{tpu_custom_call.1} parent=5 // pred_check_branch
        %1948 = sbr.rel (%p1946) target = $region72
      $region71: #{tpu_custom_call.1} parent=5 // pred_region
        %s1949 = ssub.s32 %s20, 2
        // Predicated region
        $region73: #{tpu_custom_call.1} parent=71 // pred_check
          %p1950 = pneg %p173
        $region74: #{tpu_custom_call.1} parent=71 // pred_check_branch
          %1952 = sbr.rel (%p1950) target = $region76
        $region75: #{tpu_custom_call.1} parent=71 // pred_region
          %s1953 = sand.u32 %s158, 1
          %s1954 = scalar_lea.sflag [#allocation7], %s1953
          %s1955 = sand.u32 %s158, 1
          %s1956 = smul.addr %s1955, 64
          %s1957 = scalar_lea.vmem [#allocation15], %s1956
          %1958 = dma.done %s1954, 1024
        $region76: #{tpu_custom_call.1} parent=71 // pred_fallthru
          _
      $region72: #{tpu_custom_call.1} parent=5 // pred_fallthru
        _
    $region6: #{tpu_custom_call.1} parent=1 // loop_footer
      %s24 = sadd.s32 1, %s20
    $region7: #{tpu_custom_call.1} parent=1 // loop_footer_branch
      %19 = sbr.rel target = $region3
    $region8: #{tpu_custom_call.1} parent=1 // loop_exit
      _
    %1959 = vsyncpa [#allocation6], 1
    %s1960 = scalar_lea.sflag [#allocation6], 1
    %1961 = vsyncpa %s1960, 1
    %1962 = vsyncpa [#allocation11], 1
    %1963 = vsyncpa [#allocation14], 1
    %1964 = vsyncpa [#allocation7], 1
    %s1965 = scalar_lea.sflag [#allocation7], 1
    %1966 = vsyncpa %s1965, 1
    %1967 = vsyncpa [#allocation8], 1
    %s1968 = scalar_lea.sflag [#allocation8], 1
    %1969 = vsyncpa %s1968, 1

</llo_original>
